<compile_context>
chip_gen: v5e
topology: v5e:2x2
jax: 0.10.0
libtpu: 0.0.40
codegen_flags: <defaults>
</compile_context>

<pallas_src>
import numpy as np
import jax
import jax.numpy as jnp
from jax.experimental import pallas as pl
from jax.experimental.pallas import tpu as pltpu

# ---- model hyper-parameters (from HGPLearner argparse defaults) -------------
NHID = 110          # args.nhid
NUM_FEATURES = 1    # args.num_features
WAY = 5             # num_classes

# ---- TPU-friendly padded sizes (lane-dense, multiples of 128) ---------------
NHID_PAD = 128
NHID2 = NHID // 2        # 55
NHID2_PAD = 128
WAY_PAD = 128

# ---- small demo shapes ------------------------------------------------------
B = 16              # graphs in the batch
N = 16              # nodes per graph (dense-padded)
B_TILE = 8          # graphs per grid step -> M = B_TILE*N = 128 rows per chunk
                    # (128 fills the v5e MXU; bump to 16 for 256-row tiles on v6e/v7x)


# =============================================================================
# Fused Pallas kernel: conv1..3 + readout + MLP head + log_softmax, one chunk
# of B_TILE graphs per grid step.  Weights are VMEM-resident across steps.
# =============================================================================

def fused_forward_kernel(x_ref, a_ref, wconv_ref, whead_ref, small_ref, out_ref):
    m_chunk = a_ref.shape[1]            # B_TILE * N
    b_tile = out_ref.shape[0]           # graphs in this chunk
    n_nodes = m_chunk // b_tile
    inv_n = jnp.float32(1.0 / n_nodes)

    adj = a_ref[0]                      # (M, M) block-diagonal normalized adjacency
    x_row = x_ref[0]                    # (1, M) node features (F == 1)

    # Packed small parameters: row 0 = w_c1 (1, H); rows 1..6 = biases.
    w_c1 = small_ref[0:1, :]
    b_c1 = small_ref[1:2, :]
    b_c2 = small_ref[2:3, :]
    b_c3 = small_ref[3:4, :]
    b_l1 = small_ref[4:5, :]
    b_l2 = small_ref[5:6, :]
    b_l3 = small_ref[6:7, :]

    def readout(h):
        # (M, H) -> (B_TILE, N, H); sublane-group reductions -> (B_TILE, H).
        h3 = h.reshape(b_tile, n_nodes, h.shape[-1])
        return jnp.max(h3, axis=1), jnp.sum(h3, axis=1) * inv_n

    # ---- GCN layer 1 (F == 1): relu(A @ (x*w1) + b1) == relu((A@x) * w1 + b1)
    # A@x as a lane reduction (XLU), then one VPU broadcast by the weight row.
    ax = jnp.sum(adj * x_row, axis=1, keepdims=True)                   # (M, 1)
    h = jnp.maximum(ax * w_c1 + b_c1, 0.0)                             # (M, H)
    r_max, r_mean = readout(h)

    # ---- GCN layers 2 & 3: whole-chunk X@W, block-diagonal propagation ------
    for layer, bias in ((0, b_c2), (1, b_c3)):
        xw = jnp.dot(h, wconv_ref[layer], preferred_element_type=jnp.float32)
        h = jnp.maximum(
            jnp.dot(adj, xw, preferred_element_type=jnp.float32) + bias, 0.0)
        mx, mn = readout(h)
        r_max = r_max + mx
        r_mean = r_mean + mn

    # ---- MLP head over the (never materialized) 220-wide [gmp || gap] concat:
    # two lane-aligned 128-wide matmuls summed.
    z = (jnp.dot(r_max, whead_ref[0], preferred_element_type=jnp.float32)
         + jnp.dot(r_mean, whead_ref[1], preferred_element_type=jnp.float32)
         + b_l1)
    z = jnp.maximum(z, 0.0)                                            # relu (dropout p=0)
    z = jnp.maximum(
        jnp.dot(z, whead_ref[2], preferred_element_type=jnp.float32) + b_l2, 0.0)
    logits = jnp.dot(z, whead_ref[3], preferred_element_type=jnp.float32) + b_l3

    # Mask padded class lanes so they cannot leak into the softmax.
    lane = jax.lax.broadcasted_iota(jnp.int32, logits.shape, 1)
    logits = jnp.where(lane < WAY, logits, jnp.float32(-1e30))
    m = jnp.max(logits, axis=-1, keepdims=True)
    lse = m + jnp.log(jnp.sum(jnp.exp(logits - m), axis=-1, keepdims=True))
    out_ref[...] = logits - lse


def _block_diag_chunks(adj_norm, b_tile):
    """(B, N, N) -> (B//b_tile, b_tile*N, b_tile*N) per-chunk block diagonals."""
    Bn, Nn, _ = adj_norm.shape
    nchunks = Bn // b_tile
    a = adj_norm.reshape(nchunks, b_tile, Nn, Nn)
    eye_b = jnp.eye(b_tile, dtype=adj_norm.dtype)
    blk = a[:, :, :, None, :] * eye_b[None, :, None, :, None]
    return blk.reshape(nchunks, b_tile * Nn, b_tile * Nn)


@jax.jit
def hgp_forward(pp, x, adj_norm):
    """Mirrors HGPModel.forward (minus HGPSLPool). Returns log-probs [B, WAY]."""
    Bn, Nn, Fin = x.shape
    assert Fin == NUM_FEATURES and Bn % B_TILE == 0
    nchunks = Bn // B_TILE
    m_chunk = B_TILE * Nn

    # F == 1: one (1, M) feature row per chunk; per-chunk block-diagonal adjacency.
    x_rows = x.reshape(nchunks, 1, m_chunk)
    a_blk = _block_diag_chunks(adj_norm, B_TILE)

    out_pad = pl.pallas_call(
        fused_forward_kernel,
        out_shape=jax.ShapeDtypeStruct((Bn, WAY_PAD), jnp.float32),
        grid=(nchunks,),
        in_specs=[
            pl.BlockSpec((1, 1, m_chunk), lambda i: (i, 0, 0)),          # x chunk
            pl.BlockSpec((1, m_chunk, m_chunk), lambda i: (i, 0, 0)),    # adj chunk
            pl.BlockSpec((2, NHID_PAD, NHID_PAD), lambda i: (0, 0, 0)),  # conv W (resident)
            pl.BlockSpec((4, NHID_PAD, NHID_PAD), lambda i: (0, 0, 0)),  # head W (resident)
            pl.BlockSpec((8, NHID_PAD), lambda i: (0, 0)),               # w_c1 + biases
        ],
        out_specs=pl.BlockSpec((B_TILE, WAY_PAD), lambda i: (i, 0)),
        compiler_params=pltpu.CompilerParams(
            dimension_semantics=("parallel",)),                          # v7x: 2 TCs
    )(x_rows, a_blk, pp["w_conv23"], pp["w_head"], pp["small"])
    return out_pad[:, :WAY]


# =============================================================================
# Parameters (logical shapes mirror the PyTorch module; then zero-padded+packed)
# =============================================================================

def init_params(key):
    ks = jax.random.split(key, 6)

    def glorot(k, shape):
        fan_in, fan_out = shape
        lim = np.sqrt(6.0 / (fan_in + fan_out))
        return jax.random.uniform(k, shape, jnp.float32, -lim, lim)

    return {
        # GCN convs
        "w_c1": glorot(ks[0], (NUM_FEATURES, NHID)),
        "b_c1": jnp.zeros((1, NHID), jnp.float32),
        "w_c2": glorot(ks[1], (NHID, NHID)),
        "b_c2": jnp.zeros((1, NHID), jnp.float32),
        "w_c3": glorot(ks[2], (NHID, NHID)),
        "b_c3": jnp.zeros((1, NHID), jnp.float32),
        # MLP head: lin1(2*nhid->nhid), lin2(nhid->nhid//2), lin3(nhid//2->way)
        "w_l1": glorot(ks[3], (2 * NHID, NHID)),
        "b_l1": jnp.zeros((1, NHID), jnp.float32),
        "w_l2": glorot(ks[4], (NHID, NHID2)),
        "b_l2": jnp.zeros((1, NHID2), jnp.float32),
        "w_l3": glorot(ks[5], (NHID2, WAY)),
        "b_l3": jnp.zeros((1, WAY), jnp.float32),
    }


def pack_params(p):
    """Zero-pad to lane-dense 128 and pack into 3 kernel arguments.

    Zero padding + ReLU keeps every padded lane exactly 0 through the whole
    network; padded class lanes are masked before log_softmax in the kernel.
    """
    def pad(a, rows, cols):
        return jnp.pad(a, ((0, rows - a.shape[0]), (0, cols - a.shape[1])))

    w_l1 = p["w_l1"]   # (2*NHID, NHID): first NHID rows act on gmp, rest on gap
    w_conv23 = jnp.stack([pad(p["w_c2"], NHID_PAD, NHID_PAD),
                          pad(p["w_c3"], NHID_PAD, NHID_PAD)])
    w_head = jnp.stack([pad(w_l1[:NHID, :], NHID_PAD, NHID_PAD),   # lin1 (max half)
                        pad(w_l1[NHID:, :], NHID_PAD, NHID_PAD),   # lin1 (mean half)
                        pad(p["w_l2"], NHID_PAD, NHID2_PAD),
                        pad(p["w_l3"], NHID2_PAD, WAY_PAD)])
    small = jnp.concatenate([
        pad(p["w_c1"], 1, NHID_PAD),     # row 0
        pad(p["b_c1"], 1, NHID_PAD),     # row 1
        pad(p["b_c2"], 1, NHID_PAD),     # row 2
        pad(p["b_c3"], 1, NHID_PAD),     # row 3
        pad(p["b_l1"], 1, NHID_PAD),     # row 4
        pad(p["b_l2"], 1, NHID2_PAD),    # row 5
        pad(p["b_l3"], 1, WAY_PAD),      # row 6
        jnp.zeros((1, NHID_PAD), jnp.float32),   # row 7 (sublane-pad to 8)
    ], axis=0)
    return {"w_conv23": w_conv23, "w_head": w_head, "small": small}


# =============================================================================
# Glue mirroring HGPLearner.forward
# =============================================================================

def normalize_adj(adj_raw):
    """D^-1/2 (A + I) D^-1/2 (plain JAX glue)."""
    eye = jnp.eye(adj_raw.shape[-1], dtype=jnp.float32)
    a = adj_raw + eye[None]
    deg = jnp.sum(a, axis=-1)
    dinv = jnp.where(deg > 0, 1.0 / jnp.sqrt(deg), 0.0)
    return a * dinv[:, :, None] * dinv[:, None, :]


def learner_forward(packed_params, x, adj_raw, y_np):
    """Mirrors HGPLearner.forward over one batch: returns (out, pred, loss, correct)."""
    adj_norm = normalize_adj(adj_raw)
    out = hgp_forward(packed_params, x, adj_norm)    # log_softmax outputs [B, WAY]
    pred = jnp.argmax(out, axis=1)

    # zeta: relabel each y to the index of its first appearance in the batch
    ways, zeta = [], []
    for yv in y_np.tolist():
        if yv not in ways:
            ways.append(yv)
        zeta.append(ways.index(yv))
    zeta = jnp.asarray(zeta, jnp.int32)

    # F.nll_loss(out, zeta)
    loss = -jnp.mean(jnp.take_along_axis(out, zeta[:, None], axis=1))
    correct = jnp.mean((pred == zeta).astype(jnp.float32))
    return out, pred, loss, correct


# =============================================================================
if __name__ == "__main__":
    key = jax.random.PRNGKey(0)
    kp, kx, ka, ky = jax.random.split(key, 4)

    params = init_params(kp)
    packed = pack_params(params)

    # Synthetic batch of B dense graphs with N nodes each, scalar node feature.
    x = jax.random.normal(kx, (B, N, NUM_FEATURES), jnp.float32)
    a = (jax.random.uniform(ka, (B, N, N)) > 0.7).astype(jnp.float32)
    adj_raw = jnp.maximum(a, jnp.swapaxes(a, 1, 2))          # symmetric 0/1 adjacency
    adj_raw = adj_raw * (1.0 - jnp.eye(N, dtype=jnp.float32))[None]
    y_np = np.array(jax.random.randint(ky, (B,), 0, WAY))    # graph labels

    out, pred, loss, correct = learner_forward(packed, x, adj_raw, y_np)
    jax.block_until_ready((out, pred, loss, correct))

    out_np = np.asarray(out)
    assert out_np.shape == (B, WAY)
    assert np.all(np.isfinite(out_np))
    # log_softmax rows sum to 1 in prob space (padded class lanes never leak)
    assert np.allclose(np.exp(out_np).sum(axis=1), 1.0, atol=1e-4)
    assert np.isfinite(float(loss))

    print("KERNEL_OK")
</pallas_src>

<mosaic_0001>
module attributes {stable_mosaic.version = 11 : i64} {
  func.func @fused_forward_kernel(%arg0: i32, %arg1: memref<1x1x128xf32, #tpu.memory_space<vmem>>, %arg2: memref<1x128x128xf32, #tpu.memory_space<vmem>>, %arg3: memref<2x128x128xf32, #tpu.memory_space<vmem>>, %arg4: memref<4x128x128xf32, #tpu.memory_space<vmem>>, %arg5: memref<8x128xf32, #tpu.memory_space<vmem>>, %arg6: memref<8x128xf32, #tpu.memory_space<vmem>>) attributes {dimension_semantics = [#tpu.dimension_semantics<parallel>], iteration_bounds = array<i64: 2>, scalar_prefetch = 0 : i64, scratch_operands = 0 : i64, tpu.core_type = #tpu.core_type<tc>, window_params = [{transform_indices = @transform_0, window_bounds = array<i64: 1, 1, 128>}, {transform_indices = @transform_1, window_bounds = array<i64: 1, 128, 128>}, {pipeline_mode = #tpu.pipeline_mode<synchronous>, transform_indices = @transform_2, window_bounds = array<i64: 2, 128, 128>}, {pipeline_mode = #tpu.pipeline_mode<synchronous>, transform_indices = @transform_3, window_bounds = array<i64: 4, 128, 128>}, {pipeline_mode = #tpu.pipeline_mode<synchronous>, transform_indices = @transform_4, window_bounds = array<i64: 8, 128>}, {transform_indices = @transform_5, window_bounds = array<i64: 8, 128>}]} {
    %c0 = arith.constant 0 : index
    %c0_0 = arith.constant 0 : index
    %c0_1 = arith.constant 0 : index
    %0 = vector.load %arg2[%c0, %c0_0, %c0_1] : memref<1x128x128xf32, #tpu.memory_space<vmem>>, vector<1x128x128xf32>
    %1 = vector.shape_cast %0 : vector<1x128x128xf32> to vector<128x128xf32>
    %c0_2 = arith.constant 0 : index
    %c0_3 = arith.constant 0 : index
    %c0_4 = arith.constant 0 : index
    %2 = vector.load %arg1[%c0_2, %c0_3, %c0_4] : memref<1x1x128xf32, #tpu.memory_space<vmem>>, vector<1x1x128xf32>
    %3 = vector.shape_cast %2 : vector<1x1x128xf32> to vector<1x128xf32>
    %c0_5 = arith.constant 0 : index
    %c0_6 = arith.constant 0 : index
    %4 = vector.load %arg5[%c0_5, %c0_6] : memref<8x128xf32, #tpu.memory_space<vmem>>, vector<1x128xf32>
    %c1 = arith.constant 1 : index
    %c0_7 = arith.constant 0 : index
    %5 = vector.load %arg5[%c1, %c0_7] : memref<8x128xf32, #tpu.memory_space<vmem>>, vector<1x128xf32>
    %c2 = arith.constant 2 : index
    %c0_8 = arith.constant 0 : index
    %6 = vector.load %arg5[%c2, %c0_8] : memref<8x128xf32, #tpu.memory_space<vmem>>, vector<1x128xf32>
    %c3 = arith.constant 3 : index
    %c0_9 = arith.constant 0 : index
    %7 = vector.load %arg5[%c3, %c0_9] : memref<8x128xf32, #tpu.memory_space<vmem>>, vector<1x128xf32>
    %c4 = arith.constant 4 : index
    %c0_10 = arith.constant 0 : index
    %8 = vector.load %arg5[%c4, %c0_10] : memref<8x128xf32, #tpu.memory_space<vmem>>, vector<1x128xf32>
    %c5 = arith.constant 5 : index
    %c0_11 = arith.constant 0 : index
    %9 = vector.load %arg5[%c5, %c0_11] : memref<8x128xf32, #tpu.memory_space<vmem>>, vector<1x128xf32>
    %c6 = arith.constant 6 : index
    %c0_12 = arith.constant 0 : index
    %10 = vector.load %arg5[%c6, %c0_12] : memref<8x128xf32, #tpu.memory_space<vmem>>, vector<1x128xf32>
    %11 = vector.broadcast %3 : vector<1x128xf32> to vector<128x128xf32>
    %12 = arith.mulf %1, %11 : vector<128x128xf32>
    %cst = arith.constant dense<0.000000e+00> : vector<128xf32>
    %13 = vector.multi_reduction <add>, %12, %cst [1] : vector<128x128xf32> to vector<128xf32>
    %14 = vector.shape_cast %13 : vector<128xf32> to vector<128x1xf32>
    %15 = vector.broadcast %14 : vector<128x1xf32> to vector<128x128xf32>
    %16 = vector.broadcast %4 : vector<1x128xf32> to vector<128x128xf32>
    %17 = arith.mulf %15, %16 : vector<128x128xf32>
    %18 = vector.broadcast %5 : vector<1x128xf32> to vector<128x128xf32>
    %19 = arith.addf %17, %18 : vector<128x128xf32>
    %cst_13 = arith.constant 0.000000e+00 : f32
    %20 = vector.broadcast %cst_13 : f32 to vector<128x128xf32>
    %21 = arith.maximumf %19, %20 : vector<128x128xf32>
    %22 = vector.shape_cast %21 : vector<128x128xf32> to vector<8x16x128xf32>
    %cst_14 = arith.constant dense<0xFF800000> : vector<8x128xf32>
    %23 = vector.multi_reduction <maximumf>, %22, %cst_14 [1] : vector<8x16x128xf32> to vector<8x128xf32>
    %cst_15 = arith.constant dense<0.000000e+00> : vector<8x128xf32>
    %24 = vector.multi_reduction <add>, %22, %cst_15 [1] : vector<8x16x128xf32> to vector<8x128xf32>
    %cst_16 = arith.constant 6.250000e-02 : f32
    %25 = vector.broadcast %cst_16 : f32 to vector<8x128xf32>
    %26 = arith.mulf %24, %25 : vector<8x128xf32>
    %c0_17 = arith.constant 0 : index
    %c0_18 = arith.constant 0 : index
    %c0_19 = arith.constant 0 : index
    %27 = vector.load %arg3[%c0_17, %c0_18, %c0_19] : memref<2x128x128xf32, #tpu.memory_space<vmem>>, vector<1x128x128xf32>
    %28 = vector.shape_cast %27 : vector<1x128x128xf32> to vector<128x128xf32>
    %cst_20 = arith.constant dense<0.000000e+00> : vector<128x128xf32>
    %29 = tpu.matmul %21, %28, %cst_20 {dimension_numbers = #tpu.dot_dimension_numbers<[1], [0], [0], [1], [0, 0, 1, 1], [], []>} : vector<128x128xf32>, vector<128x128xf32>, vector<128x128xf32> -> vector<128x128xf32>
    %cst_21 = arith.constant dense<0.000000e+00> : vector<128x128xf32>
    %30 = tpu.matmul %1, %29, %cst_21 {dimension_numbers = #tpu.dot_dimension_numbers<[1], [0], [0], [1], [0, 0, 1, 1], [], []>} : vector<128x128xf32>, vector<128x128xf32>, vector<128x128xf32> -> vector<128x128xf32>
    %31 = vector.broadcast %6 : vector<1x128xf32> to vector<128x128xf32>
    %32 = arith.addf %30, %31 : vector<128x128xf32>
    %cst_22 = arith.constant 0.000000e+00 : f32
    %33 = vector.broadcast %cst_22 : f32 to vector<128x128xf32>
    %34 = arith.maximumf %32, %33 : vector<128x128xf32>
    %35 = vector.shape_cast %34 : vector<128x128xf32> to vector<8x16x128xf32>
    %cst_23 = arith.constant dense<0xFF800000> : vector<8x128xf32>
    %36 = vector.multi_reduction <maximumf>, %35, %cst_23 [1] : vector<8x16x128xf32> to vector<8x128xf32>
    %cst_24 = arith.constant dense<0.000000e+00> : vector<8x128xf32>
    %37 = vector.multi_reduction <add>, %35, %cst_24 [1] : vector<8x16x128xf32> to vector<8x128xf32>
    %cst_25 = arith.constant 6.250000e-02 : f32
    %38 = vector.broadcast %cst_25 : f32 to vector<8x128xf32>
    %39 = arith.mulf %37, %38 : vector<8x128xf32>
    %40 = arith.addf %23, %36 : vector<8x128xf32>
    %41 = arith.addf %26, %39 : vector<8x128xf32>
    %c1_26 = arith.constant 1 : index
    %c0_27 = arith.constant 0 : index
    %c0_28 = arith.constant 0 : index
    %42 = vector.load %arg3[%c1_26, %c0_27, %c0_28] : memref<2x128x128xf32, #tpu.memory_space<vmem>>, vector<1x128x128xf32>
    %43 = vector.shape_cast %42 : vector<1x128x128xf32> to vector<128x128xf32>
    %cst_29 = arith.constant dense<0.000000e+00> : vector<128x128xf32>
    %44 = tpu.matmul %34, %43, %cst_29 {dimension_numbers = #tpu.dot_dimension_numbers<[1], [0], [0], [1], [0, 0, 1, 1], [], []>} : vector<128x128xf32>, vector<128x128xf32>, vector<128x128xf32> -> vector<128x128xf32>
    %cst_30 = arith.constant dense<0.000000e+00> : vector<128x128xf32>
    %45 = tpu.matmul %1, %44, %cst_30 {dimension_numbers = #tpu.dot_dimension_numbers<[1], [0], [0], [1], [0, 0, 1, 1], [], []>} : vector<128x128xf32>, vector<128x128xf32>, vector<128x128xf32> -> vector<128x128xf32>
    %46 = vector.broadcast %7 : vector<1x128xf32> to vector<128x128xf32>
    %47 = arith.addf %45, %46 : vector<128x128xf32>
    %cst_31 = arith.constant 0.000000e+00 : f32
    %48 = vector.broadcast %cst_31 : f32 to vector<128x128xf32>
    %49 = arith.maximumf %47, %48 : vector<128x128xf32>
    %50 = vector.shape_cast %49 : vector<128x128xf32> to vector<8x16x128xf32>
    %cst_32 = arith.constant dense<0xFF800000> : vector<8x128xf32>
    %51 = vector.multi_reduction <maximumf>, %50, %cst_32 [1] : vector<8x16x128xf32> to vector<8x128xf32>
    %cst_33 = arith.constant dense<0.000000e+00> : vector<8x128xf32>
    %52 = vector.multi_reduction <add>, %50, %cst_33 [1] : vector<8x16x128xf32> to vector<8x128xf32>
    %cst_34 = arith.constant 6.250000e-02 : f32
    %53 = vector.broadcast %cst_34 : f32 to vector<8x128xf32>
    %54 = arith.mulf %52, %53 : vector<8x128xf32>
    %55 = arith.addf %40, %51 : vector<8x128xf32>
    %56 = arith.addf %41, %54 : vector<8x128xf32>
    %c0_35 = arith.constant 0 : index
    %c0_36 = arith.constant 0 : index
    %c0_37 = arith.constant 0 : index
    %57 = vector.load %arg4[%c0_35, %c0_36, %c0_37] : memref<4x128x128xf32, #tpu.memory_space<vmem>>, vector<1x128x128xf32>
    %58 = vector.shape_cast %57 : vector<1x128x128xf32> to vector<128x128xf32>
    %cst_38 = arith.constant dense<0.000000e+00> : vector<8x128xf32>
    %59 = tpu.matmul %55, %58, %cst_38 {dimension_numbers = #tpu.dot_dimension_numbers<[1], [0], [0], [1], [0, 0, 1, 1], [], []>} : vector<8x128xf32>, vector<128x128xf32>, vector<8x128xf32> -> vector<8x128xf32>
    %c1_39 = arith.constant 1 : index
    %c0_40 = arith.constant 0 : index
    %c0_41 = arith.constant 0 : index
    %60 = vector.load %arg4[%c1_39, %c0_40, %c0_41] : memref<4x128x128xf32, #tpu.memory_space<vmem>>, vector<1x128x128xf32>
    %61 = vector.shape_cast %60 : vector<1x128x128xf32> to vector<128x128xf32>
    %cst_42 = arith.constant dense<0.000000e+00> : vector<8x128xf32>
    %62 = tpu.matmul %56, %61, %cst_42 {dimension_numbers = #tpu.dot_dimension_numbers<[1], [0], [0], [1], [0, 0, 1, 1], [], []>} : vector<8x128xf32>, vector<128x128xf32>, vector<8x128xf32> -> vector<8x128xf32>
    %63 = arith.addf %59, %62 : vector<8x128xf32>
    %64 = vector.broadcast %8 : vector<1x128xf32> to vector<8x128xf32>
    %65 = arith.addf %63, %64 : vector<8x128xf32>
    %cst_43 = arith.constant 0.000000e+00 : f32
    %66 = vector.broadcast %cst_43 : f32 to vector<8x128xf32>
    %67 = arith.maximumf %65, %66 : vector<8x128xf32>
    %c2_44 = arith.constant 2 : index
    %c0_45 = arith.constant 0 : index
    %c0_46 = arith.constant 0 : index
    %68 = vector.load %arg4[%c2_44, %c0_45, %c0_46] : memref<4x128x128xf32, #tpu.memory_space<vmem>>, vector<1x128x128xf32>
    %69 = vector.shape_cast %68 : vector<1x128x128xf32> to vector<128x128xf32>
    %cst_47 = arith.constant dense<0.000000e+00> : vector<8x128xf32>
    %70 = tpu.matmul %67, %69, %cst_47 {dimension_numbers = #tpu.dot_dimension_numbers<[1], [0], [0], [1], [0, 0, 1, 1], [], []>} : vector<8x128xf32>, vector<128x128xf32>, vector<8x128xf32> -> vector<8x128xf32>
    %71 = vector.broadcast %9 : vector<1x128xf32> to vector<8x128xf32>
    %72 = arith.addf %70, %71 : vector<8x128xf32>
    %cst_48 = arith.constant 0.000000e+00 : f32
    %73 = vector.broadcast %cst_48 : f32 to vector<8x128xf32>
    %74 = arith.maximumf %72, %73 : vector<8x128xf32>
    %c3_49 = arith.constant 3 : index
    %c0_50 = arith.constant 0 : index
    %c0_51 = arith.constant 0 : index
    %75 = vector.load %arg4[%c3_49, %c0_50, %c0_51] : memref<4x128x128xf32, #tpu.memory_space<vmem>>, vector<1x128x128xf32>
    %76 = vector.shape_cast %75 : vector<1x128x128xf32> to vector<128x128xf32>
    %cst_52 = arith.constant dense<0.000000e+00> : vector<8x128xf32>
    %77 = tpu.matmul %74, %76, %cst_52 {dimension_numbers = #tpu.dot_dimension_numbers<[1], [0], [0], [1], [0, 0, 1, 1], [], []>} : vector<8x128xf32>, vector<128x128xf32>, vector<8x128xf32> -> vector<8x128xf32>
    %78 = vector.broadcast %10 : vector<1x128xf32> to vector<8x128xf32>
    %79 = arith.addf %77, %78 : vector<8x128xf32>
    %80 = tpu.iota {dimensions = array<i32: 1>} : vector<8x128xi32>
    %c5_i32 = arith.constant 5 : i32
    %81 = vector.broadcast %c5_i32 : i32 to vector<8x128xi32>
    %82 = arith.cmpi slt, %80, %81 : vector<8x128xi32>
    %cst_53 = arith.constant -1.000000e+30 : f32
    %83 = vector.broadcast %cst_53 : f32 to vector<8x128xf32>
    %84 = arith.select %82, %79, %83 : vector<8x128xi1>, vector<8x128xf32>
    %cst_54 = arith.constant dense<0xFF800000> : vector<8xf32>
    %85 = vector.multi_reduction <maximumf>, %84, %cst_54 [1] : vector<8x128xf32> to vector<8xf32>
    %86 = vector.shape_cast %85 : vector<8xf32> to vector<8x1xf32>
    %87 = vector.broadcast %86 : vector<8x1xf32> to vector<8x128xf32>
    %88 = arith.subf %84, %87 : vector<8x128xf32>
    %89 = math.exp %88 : vector<8x128xf32>
    %cst_55 = arith.constant dense<0.000000e+00> : vector<8xf32>
    %90 = vector.multi_reduction <add>, %89, %cst_55 [1] : vector<8x128xf32> to vector<8xf32>
    %91 = vector.shape_cast %90 : vector<8xf32> to vector<8x1xf32>
    %92 = math.log %91 : vector<8x1xf32>
    %93 = arith.addf %86, %92 : vector<8x1xf32>
    %94 = vector.broadcast %93 : vector<8x1xf32> to vector<8x128xf32>
    %95 = arith.subf %84, %94 : vector<8x128xf32>
    %c0_56 = arith.constant 0 : index
    %c0_57 = arith.constant 0 : index
    %96 = vector.load %arg6[%c0_56, %c0_57] : memref<8x128xf32, #tpu.memory_space<vmem>>, vector<8x128xf32>
    tpu.vector_store %arg6[%c0_56, %c0_57], %95 {strides = array<i32>} : memref<8x128xf32, #tpu.memory_space<vmem>>, vector<8x128xf32>,
    return
  }
  func.func @transform_0(%arg0: i32) -> (i32, i32, i32) {
    %c0_i32 = arith.constant 0 : i32
    %c0_i32_0 = arith.constant 0 : i32
    %c0_i32_1 = arith.constant 0 : i32
    return %arg0, %c0_i32, %c0_i32_0 : i32, i32, i32
  }
  func.func @transform_1(%arg0: i32) -> (i32, i32, i32) {
    %c0_i32 = arith.constant 0 : i32
    %c0_i32_0 = arith.constant 0 : i32
    %c0_i32_1 = arith.constant 0 : i32
    return %arg0, %c0_i32, %c0_i32_0 : i32, i32, i32
  }
  func.func @transform_2(%arg0: i32) -> (i32, i32, i32) {
    %c0_i32 = arith.constant 0 : i32
    %c0_i32_0 = arith.constant 0 : i32
    %c0_i32_1 = arith.constant 0 : i32
    %c0_i32_2 = arith.constant 0 : i32
    return %c0_i32, %c0_i32_0, %c0_i32_1 : i32, i32, i32
  }
  func.func @transform_3(%arg0: i32) -> (i32, i32, i32) {
    %c0_i32 = arith.constant 0 : i32
    %c0_i32_0 = arith.constant 0 : i32
    %c0_i32_1 = arith.constant 0 : i32
    %c0_i32_2 = arith.constant 0 : i32
    return %c0_i32, %c0_i32_0, %c0_i32_1 : i32, i32, i32
  }
  func.func @transform_4(%arg0: i32) -> (i32, i32) {
    %c0_i32 = arith.constant 0 : i32
    %c0_i32_0 = arith.constant 0 : i32
    %c0_i32_1 = arith.constant 0 : i32
    return %c0_i32, %c0_i32_0 : i32, i32
  }
  func.func @transform_5(%arg0: i32) -> (i32, i32) {
    %c0_i32 = arith.constant 0 : i32
    %c0_i32_0 = arith.constant 0 : i32
    return %arg0, %c0_i32 : i32, i32
  }
}

</mosaic_0001>

<llo_original>
// kernel: hgp_forward.1
$region0: #{hgp_forward.1}
  #allocation0 [shape = 'u32[]', space=smem, size = 0x4, offset = 0x4, fixed_abs, tag = 'smem constant byte address 0x4 - core index']
  #allocation1 [shape = 'u32[72,128]{1,0:T(1,128)}', space=vmem, size = 0x9000, scoped, tag = 'internal scratch']
  %s0 = inlined_call_operand.vmem [shape: f32[2,1,128], index: 0, kind: input, shape index: {}]
  %s1 = inlined_call_operand.vmem [shape: f32[2,128,128], index: 1, kind: input, shape index: {}]
  %s2 = inlined_call_operand.vmem [shape: f32[2,128,128], index: 2, kind: input, shape index: {}]
  %s3 = inlined_call_operand.vmem [shape: f32[4,128,128], index: 3, kind: input, shape index: {}]
  %s4 = inlined_call_operand.vmem [shape: f32[8,128], index: 4, kind: input, shape index: {}]
  %s5 = inlined_call_operand.vmem [shape: f32[16,128], index: 5, kind: output, shape index: {}]
  %s6 = sld [smem:[#allocation0]]
  $region53: #{hgp_forward.1} parent=0
    _
  %s8 = ssub.s32 1, %s6
  %s9 = scalar_select 0, %s8, %s6
  loop: start=0, step=1, limit=4
  $region2: #{hgp_forward.1} parent=0 // loop_pre_header
    _
  $region3: #{hgp_forward.1} parent=0 // loop_header
    %s11 = sphi 0, %s15
    %p12 = scmp.ge.s32.totalorder %s11, 4
    %s21 = sphi 0, %s23
    %s24 = sphi 0, %s21
    %s25 = sphi 0, %s24
    %s41 = sphi 0, %s25
    %s47 = sphi 0, %s49
    %s50 = sphi 0, %s47
    %s51 = sphi 0, %s50
    %s67 = sphi 0, %s51
    %s71 = sphi 0, %s71
    %s73 = sphi 0, %s71
    %s74 = sphi 0, %s73
    %s88 = sphi 0, %s74
    %s92 = sphi 0, %s92
    %s94 = sphi 0, %s92
    %s95 = sphi 0, %s94
    %s109 = sphi 0, %s95
    %s113 = sphi 0, %s113
    %s115 = sphi 0, %s113
    %s116 = sphi 0, %s115
    %s130 = sphi 0, %s116
    %s136 = sphi 0, %s138
    %s139 = sphi 0, %s136
    %s140 = sphi 0, %s139
    %s156 = sphi 0, %s140
  $region4: #{hgp_forward.1} parent=0 // loop_header_branch
    %14 = sbr.rel (%p12) target = $region8
  $region5: #{hgp_forward.1} parent=0 // loop_body
    %s16 = ssub.s32 %s11, 1
    %s17 = ssub.s32 %s11, 2
    %s18 = sadd.s32 %s11, 1
    %s19 = ssub.s32 %s11, %s18
    %p20 = scmp.eq.s32.totalorder %s19, 0
    %s22 = sadd.s32 %s21, 1
    %s23 = scalar_select %p20, %s21, %s22
    %p26 = pneg %p20
    %p27 = scmp.eq.s32.totalorder %s11, 1
    %p28 = por %p26, %p27
    %p29 = scmp.ne.s32.totalorder %s21, %s24
    %p30 = scmp.eq.s32.totalorder %s11, 0
    %p31 = por %p29, %p30
    %p32 = scmp.ne.s32.totalorder %s21, %s24
    %p33 = scmp.eq.s32.totalorder %s16, 1
    %p34 = por %p32, %p33
    %p35 = scmp.ne.s32.totalorder %s24, %s25
    %p36 = scmp.eq.s32.totalorder %s16, 0
    %p37 = por %p35, %p36
    %p38 = scmp.ne.s32.totalorder %s24, %s25
    %p39 = scmp.eq.s32.totalorder %s17, 1
    %p40 = por %p38, %p39
    %p42 = scmp.ne.s32.totalorder %s25, %s41
    %p43 = scmp.eq.s32.totalorder %s17, 0
    %p44 = por %p42, %p43
    %s45 = ssub.s32 %s11, %s18
    %p46 = scmp.eq.s32.totalorder %s45, 0
    %s48 = sadd.s32 %s47, 1
    %s49 = scalar_select %p46, %s47, %s48
    %p52 = pneg %p46
    %p53 = scmp.eq.s32.totalorder %s11, 1
    %p54 = por %p52, %p53
    %p55 = scmp.ne.s32.totalorder %s47, %s50
    %p56 = scmp.eq.s32.totalorder %s11, 0
    %p57 = por %p55, %p56
    %p58 = scmp.ne.s32.totalorder %s47, %s50
    %p59 = scmp.eq.s32.totalorder %s16, 1
    %p60 = por %p58, %p59
    %p61 = scmp.ne.s32.totalorder %s50, %s51
    %p62 = scmp.eq.s32.totalorder %s16, 0
    %p63 = por %p61, %p62
    %p64 = scmp.ne.s32.totalorder %s50, %s51
    %p65 = scmp.eq.s32.totalorder %s17, 1
    %p66 = por %p64, %p65
    %p68 = scmp.ne.s32.totalorder %s51, %s67
    %p69 = scmp.eq.s32.totalorder %s17, 0
    %p70 = por %p68, %p69
    %s72 = sadd.s32 %s71, 1
    %p75 = scmp.eq.s32.totalorder %s11, 1
    %p76 = scmp.ne.s32.totalorder %s71, %s73
    %p77 = scmp.eq.s32.totalorder %s11, 0
    %p78 = por %p76, %p77
    %p79 = scmp.ne.s32.totalorder %s71, %s73
    %p80 = scmp.eq.s32.totalorder %s16, 1
    %p81 = por %p79, %p80
    %p82 = scmp.ne.s32.totalorder %s73, %s74
    %p83 = scmp.eq.s32.totalorder %s16, 0
    %p84 = por %p82, %p83
    %p85 = scmp.ne.s32.totalorder %s73, %s74
    %p86 = scmp.eq.s32.totalorder %s17, 1
    %p87 = por %p85, %p86
    %p89 = scmp.ne.s32.totalorder %s74, %s88
    %p90 = scmp.eq.s32.totalorder %s17, 0
    %p91 = por %p89, %p90
    %s93 = sadd.s32 %s92, 1
    %p96 = scmp.eq.s32.totalorder %s11, 1
    %p97 = scmp.ne.s32.totalorder %s92, %s94
    %p98 = scmp.eq.s32.totalorder %s11, 0
    %p99 = por %p97, %p98
    %p100 = scmp.ne.s32.totalorder %s92, %s94
    %p101 = scmp.eq.s32.totalorder %s16, 1
    %p102 = por %p100, %p101
    %p103 = scmp.ne.s32.totalorder %s94, %s95
    %p104 = scmp.eq.s32.totalorder %s16, 0
    %p105 = por %p103, %p104
    %p106 = scmp.ne.s32.totalorder %s94, %s95
    %p107 = scmp.eq.s32.totalorder %s17, 1
    %p108 = por %p106, %p107
    %p110 = scmp.ne.s32.totalorder %s95, %s109
    %p111 = scmp.eq.s32.totalorder %s17, 0
    %p112 = por %p110, %p111
    %s114 = sadd.s32 %s113, 1
    %p117 = scmp.eq.s32.totalorder %s11, 1
    %p118 = scmp.ne.s32.totalorder %s113, %s115
    %p119 = scmp.eq.s32.totalorder %s11, 0
    %p120 = por %p118, %p119
    %p121 = scmp.ne.s32.totalorder %s113, %s115
    %p122 = scmp.eq.s32.totalorder %s16, 1
    %p123 = por %p121, %p122
    %p124 = scmp.ne.s32.totalorder %s115, %s116
    %p125 = scmp.eq.s32.totalorder %s16, 0
    %p126 = por %p124, %p125
    %p127 = scmp.ne.s32.totalorder %s115, %s116
    %p128 = scmp.eq.s32.totalorder %s17, 1
    %p129 = por %p127, %p128
    %p131 = scmp.ne.s32.totalorder %s116, %s130
    %p132 = scmp.eq.s32.totalorder %s17, 0
    %p133 = por %p131, %p132
    %s134 = ssub.s32 %s11, %s18
    %p135 = scmp.eq.s32.totalorder %s134, 0
    %s137 = sadd.s32 %s136, 1
    %s138 = scalar_select %p135, %s136, %s137
    %p141 = pneg %p135
    %p142 = scmp.eq.s32.totalorder %s11, 1
    %p143 = por %p141, %p142
    %p144 = scmp.ne.s32.totalorder %s136, %s139
    %p145 = scmp.eq.s32.totalorder %s11, 0
    %p146 = por %p144, %p145
    %p147 = scmp.ne.s32.totalorder %s136, %s139
    %p148 = scmp.eq.s32.totalorder %s16, 1
    %p149 = por %p147, %p148
    %p150 = scmp.ne.s32.totalorder %s139, %s140
    %p151 = scmp.eq.s32.totalorder %s16, 0
    %p152 = por %p150, %p151
    %p153 = scmp.ne.s32.totalorder %s139, %s140
    %p154 = scmp.eq.s32.totalorder %s17, 1
    %p155 = por %p153, %p154
    %p157 = scmp.ne.s32.totalorder %s140, %s156
    %p158 = scmp.eq.s32.totalorder %s17, 0
    %p159 = por %p157, %p158
    %p160 = scmp.le.s32.totalorder 1, %s11
    %p161 = scmp.lt.s32.totalorder %s11, 3
    %p162 = pnand %p160, %p161
    %p163 = pneg %p162
    // Predicated region
    $region9: #{hgp_forward.1} parent=5 // pred_check
      _
    $region10: #{hgp_forward.1} parent=5 // pred_check_branch
      %165 = sbr.rel (%p162) target = $region12
    $region11: #{hgp_forward.1} parent=5 // pred_region
      %s166 = ssub.s32 %s11, 1
      // Predicated region
      $region13: #{hgp_forward.1} parent=11 // pred_check
        %p167 = pneg %p84
      $region14: #{hgp_forward.1} parent=11 // pred_check_branch
        %169 = sbr.rel (%p167) target = $region16
      $region15: #{hgp_forward.1} parent=11 // pred_region
        _
      $region16: #{hgp_forward.1} parent=11 // pred_fallthru
        _
      // Predicated region
      $region17: #{hgp_forward.1} parent=11 // pred_check
        %p170 = pneg %p105
      $region18: #{hgp_forward.1} parent=11 // pred_check_branch
        %172 = sbr.rel (%p170) target = $region20
      $region19: #{hgp_forward.1} parent=11 // pred_region
        _
      $region20: #{hgp_forward.1} parent=11 // pred_fallthru
        _
      // Predicated region
      $region21: #{hgp_forward.1} parent=11 // pred_check
        %p173 = pneg %p126
      $region22: #{hgp_forward.1} parent=11 // pred_check_branch
        %175 = sbr.rel (%p173) target = $region24
      $region23: #{hgp_forward.1} parent=11 // pred_region
        _
      $region24: #{hgp_forward.1} parent=11 // pred_fallthru
        _
    $region12: #{hgp_forward.1} parent=5 // pred_fallthru
      _
    %p176 = scmp.lt.s32.totalorder %s11, 2
    // Predicated region
    $region25: #{hgp_forward.1} parent=5 // pred_check
      %p177 = pneg %p176
    $region26: #{hgp_forward.1} parent=5 // pred_check_branch
      %179 = sbr.rel (%p177) target = $region28
    $region27: #{hgp_forward.1} parent=5 // pred_region
      // Predicated region
      $region29: #{hgp_forward.1} parent=27 // pred_check
        %p180 = pneg %p31
      $region30: #{hgp_forward.1} parent=27 // pred_check_branch
        %182 = sbr.rel (%p180) target = $region32
      $region31: #{hgp_forward.1} parent=27 // pred_region
        %p183 = scmp.lt.s32.totalorder %s11, 1
        %s184 = scalar_select %p183, %s11, 1
        %s185 = scalar_lea.vmem %s0, %s184
      $region32: #{hgp_forward.1} parent=27 // pred_fallthru
        _
      // Predicated region
      $region33: #{hgp_forward.1} parent=27 // pred_check
        %p186 = pneg %p57
      $region34: #{hgp_forward.1} parent=27 // pred_check_branch
        %188 = sbr.rel (%p186) target = $region36
      $region35: #{hgp_forward.1} parent=27 // pred_region
        %p189 = scmp.lt.s32.totalorder %s11, 1
        %s190 = scalar_select %p189, %s11, 1
        %s191 = smul.addr %s190, 16
        %s192 = smul.addr %s191, 8
        %s193 = scalar_lea.vmem %s1, %s192
      $region36: #{hgp_forward.1} parent=27 // pred_fallthru
        _
    $region28: #{hgp_forward.1} parent=5 // pred_fallthru
      _
    %p194 = scmp.le.s32.totalorder 1, %s11
    %p195 = scmp.lt.s32.totalorder %s11, 3
    %p196 = pnand %p194, %p195
    %p197 = pneg %p196
    // Predicated region
    $region37: #{hgp_forward.1} parent=5 // pred_check
      _
    $region38: #{hgp_forward.1} parent=5 // pred_check_branch
      %199 = sbr.rel (%p196) target = $region40
    $region39: #{hgp_forward.1} parent=5 // pred_region
      %s200 = ssub.s32 %s11, 1
      %p201 = scmp.lt.s32.totalorder %s16, 1
      %s202 = scalar_select %p201, %s16, 1
      %s203 = scalar_lea.vmem %s0, %s202
      %p204 = pneg %p37
      %p205 = pneg %p34
      %p206 = scmp.lt.s32.totalorder %s16, 1
      %s207 = scalar_select %p206, %s16, 1
      %s208 = smul.addr %s207, 16
      %s209 = smul.addr %s208, 8
      %s210 = scalar_lea.vmem %s1, %s209
      %p211 = pneg %p63
      %p212 = pneg %p60
      %p213 = pneg %p84
      %p214 = pneg %p81
      %p215 = pneg %p105
      %p216 = pneg %p102
      %p217 = pneg %p126
      %p218 = pneg %p123
      %p219 = pneg %p152
      %p220 = pneg %p149
      %p221 = scmp.lt.s32.totalorder %s16, 1
      %s222 = scalar_select %p221, %s16, 1
      %s223 = smul.addr %s222, 8
      %s224 = scalar_lea.vmem %s5, %s223
      %p225 = scmp.lt.s32.totalorder %s16, 1
      %s226 = scalar_select %p225, %s16, 1
      %s227 = scalar_lea.vmem %s0, %s226
      %p228 = scmp.lt.s32.totalorder %s16, 1
      %s229 = scalar_select %p228, %s16, 1
      %s230 = smul.addr %s229, 16
      %s231 = smul.addr %s230, 8
      %s232 = scalar_lea.vmem %s1, %s231
      %p233 = scmp.lt.s32.totalorder %s16, 1
      %s234 = scalar_select %p233, %s16, 1
      %s235 = smul.addr %s234, 8
      %s236 = scalar_lea.vmem %s5, %s235
      %v237 = vld [vmem:[%s232] sm:$0xff]
      %v238 = vld [vmem:[%s232 + $0x8] sm:$0xff]
      %v239 = vld [vmem:[%s232 + $0x10] sm:$0xff]
      %v240 = vld [vmem:[%s232 + $0x18] sm:$0xff]
      %v241 = vld [vmem:[%s232 + $0x20] sm:$0xff]
      %v242 = vld [vmem:[%s232 + $0x28] sm:$0xff]
      %v243 = vld [vmem:[%s232 + $0x30] sm:$0xff]
      %v244 = vld [vmem:[%s232 + $0x38] sm:$0xff]
      %v245 = vld [vmem:[%s232 + $0x40] sm:$0xff]
      %v246 = vld [vmem:[%s232 + $0x48] sm:$0xff]
      %v247 = vld [vmem:[%s232 + $0x50] sm:$0xff]
      %v248 = vld [vmem:[%s232 + $0x58] sm:$0xff]
      %v249 = vld [vmem:[%s232 + $0x60] sm:$0xff]
      %v250 = vld [vmem:[%s232 + $0x68] sm:$0xff]
      %v251 = vld [vmem:[%s232 + $0x70] sm:$0xff]
      %v252 = vld [vmem:[%s232 + $0x78] sm:$0xff]
      %v253 = vld [vmem:[%s227] sm:$0x1]
      %v254 = vld [vmem:[%s4] sm:$0x1]
      %v255 = vld [vmem:[%s4 + $0x1] sm:$0x1]
      %v256 = vld [vmem:[%s4 + $0x2] sm:$0x1]
      %v257 = vld [vmem:[%s4 + $0x3] sm:$0x1]
      %v258 = vld [vmem:[%s4 + $0x4] sm:$0x1]
      %v259 = vld [vmem:[%s4 + $0x5] sm:$0x1]
      %v260 = vld [vmem:[%s4 + $0x6] sm:$0x1]
      %v262 = vperm.slane %v253, 0
      %v264 = vmul.f32 %v237, %v262
      %v265 = vmul.f32 %v238, %v262
      %v266 = vmul.f32 %v239, %v262
      %v267 = vmul.f32 %v240, %v262
      %v268 = vmul.f32 %v241, %v262
      %v269 = vmul.f32 %v242, %v262
      %v270 = vmul.f32 %v243, %v262
      %v271 = vmul.f32 %v244, %v262
      %v272 = vmul.f32 %v245, %v262
      %v273 = vmul.f32 %v246, %v262
      %v274 = vmul.f32 %v247, %v262
      %v275 = vmul.f32 %v248, %v262
      %v276 = vmul.f32 %v249, %v262
      %v277 = vmul.f32 %v250, %v262
      %v278 = vmul.f32 %v251, %v262
      %v279 = vmul.f32 %v252, %v262
      %280 = vadd.xlane.f32.xlu0 %v264
      %v281 = vpop.xlane.xlu0 %280
      %282 = vadd.xlane.f32.xlu0 %v265
      %v283 = vpop.xlane.xlu0 %282
      %284 = vadd.xlane.f32.xlu0 %v266
      %v285 = vpop.xlane.xlu0 %284
      %286 = vadd.xlane.f32.xlu0 %v267
      %v287 = vpop.xlane.xlu0 %286
      %288 = vadd.xlane.f32.xlu0 %v268
      %v289 = vpop.xlane.xlu0 %288
      %290 = vadd.xlane.f32.xlu0 %v269
      %v291 = vpop.xlane.xlu0 %290
      %292 = vadd.xlane.f32.xlu0 %v270
      %v293 = vpop.xlane.xlu0 %292
      %294 = vadd.xlane.f32.xlu0 %v271
      %v295 = vpop.xlane.xlu0 %294
      %296 = vadd.xlane.f32.xlu0 %v272
      %v297 = vpop.xlane.xlu0 %296
      %298 = vadd.xlane.f32.xlu0 %v273
      %v299 = vpop.xlane.xlu0 %298
      %300 = vadd.xlane.f32.xlu0 %v274
      %v301 = vpop.xlane.xlu0 %300
      %302 = vadd.xlane.f32.xlu0 %v275
      %v303 = vpop.xlane.xlu0 %302
      %304 = vadd.xlane.f32.xlu0 %v276
      %v305 = vpop.xlane.xlu0 %304
      %306 = vadd.xlane.f32.xlu0 %v277
      %v307 = vpop.xlane.xlu0 %306
      %308 = vadd.xlane.f32.xlu0 %v278
      %v309 = vpop.xlane.xlu0 %308
      %310 = vadd.xlane.f32.xlu0 %v279
      %v311 = vpop.xlane.xlu0 %310
      %v312 = vperm.slane %v254, 0
      %v313 = vmul.f32 %v281, %v312
      %v314 = vmul.f32 %v283, %v312
      %v315 = vmul.f32 %v285, %v312
      %v316 = vmul.f32 %v287, %v312
      %v317 = vmul.f32 %v289, %v312
      %v318 = vmul.f32 %v291, %v312
      %v319 = vmul.f32 %v293, %v312
      %v320 = vmul.f32 %v295, %v312
      %v321 = vmul.f32 %v297, %v312
      %v322 = vmul.f32 %v299, %v312
      %v323 = vmul.f32 %v301, %v312
      %v324 = vmul.f32 %v303, %v312
      %v325 = vmul.f32 %v305, %v312
      %v326 = vmul.f32 %v307, %v312
      %v327 = vmul.f32 %v309, %v312
      %v328 = vmul.f32 %v311, %v312
      %v329 = vperm.slane %v255, 0
      %v330 = vadd.f32 %v313, %v329
      %v331 = vadd.f32 %v314, %v329
      %v332 = vadd.f32 %v315, %v329
      %v333 = vadd.f32 %v316, %v329
      %v334 = vadd.f32 %v317, %v329
      %v335 = vadd.f32 %v318, %v329
      %v336 = vadd.f32 %v319, %v329
      %v337 = vadd.f32 %v320, %v329
      %v338 = vadd.f32 %v321, %v329
      %v339 = vadd.f32 %v322, %v329
      %v340 = vadd.f32 %v323, %v329
      %v341 = vadd.f32 %v324, %v329
      %v342 = vadd.f32 %v325, %v329
      %v343 = vadd.f32 %v326, %v329
      %v344 = vadd.f32 %v327, %v329
      %v345 = vadd.f32 %v328, %v329
      %v346 = vmax.f32 %v330, 0.0
      %v347 = vmax.f32 %v331, 0.0
      %v348 = vmax.f32 %v332, 0.0
      %v349 = vmax.f32 %v333, 0.0
      %v350 = vmax.f32 %v334, 0.0
      %v351 = vmax.f32 %v335, 0.0
      %v352 = vmax.f32 %v336, 0.0
      %v353 = vmax.f32 %v337, 0.0
      %v354 = vmax.f32 %v338, 0.0
      %v355 = vmax.f32 %v339, 0.0
      %v356 = vmax.f32 %v340, 0.0
      %v357 = vmax.f32 %v341, 0.0
      %v358 = vmax.f32 %v342, 0.0
      %v359 = vmax.f32 %v343, 0.0
      %v360 = vmax.f32 %v344, 0.0
      %v361 = vmax.f32 %v345, 0.0
      %v362 = vmax.f32 %v346, %v347
      %v363 = vrot.slane %v362, 4
      %v364 = vmax.f32 %v362, %v363
      %v365 = vrot.slane %v364, 2
      %v366 = vmax.f32 %v364, %v365
      %v367 = vrot.slane %v366, 1
      %v368 = vmax.f32 %v366, %v367
      %v369 = vmax.f32 %v348, %v349
      %v370 = vrot.slane %v369, 4
      %v371 = vmax.f32 %v369, %v370
      %v372 = vrot.slane %v371, 2
      %v373 = vmax.f32 %v371, %v372
      %v374 = vrot.slane %v373, 1
      %v375 = vmax.f32 %v373, %v374
      %v376 = vmax.f32 %v350, %v351
      %v377 = vrot.slane %v376, 4
      %v378 = vmax.f32 %v376, %v377
      %v379 = vrot.slane %v378, 2
      %v380 = vmax.f32 %v378, %v379
      %v381 = vrot.slane %v380, 1
      %v382 = vmax.f32 %v380, %v381
      %v383 = vmax.f32 %v352, %v353
      %v384 = vrot.slane %v383, 4
      %v385 = vmax.f32 %v383, %v384
      %v386 = vrot.slane %v385, 2
      %v387 = vmax.f32 %v385, %v386
      %v388 = vrot.slane %v387, 1
      %v389 = vmax.f32 %v387, %v388
      %v390 = vmax.f32 %v354, %v355
      %v391 = vrot.slane %v390, 4
      %v392 = vmax.f32 %v390, %v391
      %v393 = vrot.slane %v392, 2
      %v394 = vmax.f32 %v392, %v393
      %v395 = vrot.slane %v394, 1
      %v396 = vmax.f32 %v394, %v395
      %v397 = vmax.f32 %v356, %v357
      %v398 = vrot.slane %v397, 4
      %v399 = vmax.f32 %v397, %v398
      %v400 = vrot.slane %v399, 2
      %v401 = vmax.f32 %v399, %v400
      %v402 = vrot.slane %v401, 1
      %v403 = vmax.f32 %v401, %v402
      %v404 = vmax.f32 %v358, %v359
      %v405 = vrot.slane %v404, 4
      %v406 = vmax.f32 %v404, %v405
      %v407 = vrot.slane %v406, 2
      %v408 = vmax.f32 %v406, %v407
      %v409 = vrot.slane %v408, 1
      %v410 = vmax.f32 %v408, %v409
      %v411 = vmax.f32 %v360, %v361
      %v412 = vrot.slane %v411, 4
      %v413 = vmax.f32 %v411, %v412
      %v414 = vrot.slane %v413, 2
      %v415 = vmax.f32 %v413, %v414
      %v416 = vrot.slane %v415, 1
      %v417 = vmax.f32 %v415, %v416
      %v418 = vadd.f32 %v346, %v347
      %v419 = vrot.slane %v418, 4
      %v420 = vadd.f32 %v418, %v419
      %v421 = vrot.slane %v420, 2
      %v422 = vadd.f32 %v420, %v421
      %v423 = vrot.slane %v422, 1
      %v424 = vadd.f32 %v422, %v423
      %v425 = vadd.f32 %v348, %v349
      %v426 = vrot.slane %v425, 4
      %v427 = vadd.f32 %v425, %v426
      %v428 = vrot.slane %v427, 2
      %v429 = vadd.f32 %v427, %v428
      %v430 = vrot.slane %v429, 1
      %v431 = vadd.f32 %v429, %v430
      %v432 = vadd.f32 %v350, %v351
      %v433 = vrot.slane %v432, 4
      %v434 = vadd.f32 %v432, %v433
      %v435 = vrot.slane %v434, 2
      %v436 = vadd.f32 %v434, %v435
      %v437 = vrot.slane %v436, 1
      %v438 = vadd.f32 %v436, %v437
      %v439 = vadd.f32 %v352, %v353
      %v440 = vrot.slane %v439, 4
      %v441 = vadd.f32 %v439, %v440
      %v442 = vrot.slane %v441, 2
      %v443 = vadd.f32 %v441, %v442
      %v444 = vrot.slane %v443, 1
      %v445 = vadd.f32 %v443, %v444
      %v446 = vadd.f32 %v354, %v355
      %v447 = vrot.slane %v446, 4
      %v448 = vadd.f32 %v446, %v447
      %v449 = vrot.slane %v448, 2
      %v450 = vadd.f32 %v448, %v449
      %v451 = vrot.slane %v450, 1
      %v452 = vadd.f32 %v450, %v451
      %v453 = vadd.f32 %v356, %v357
      %v454 = vrot.slane %v453, 4
      %v455 = vadd.f32 %v453, %v454
      %v456 = vrot.slane %v455, 2
      %v457 = vadd.f32 %v455, %v456
      %v458 = vrot.slane %v457, 1
      %v459 = vadd.f32 %v457, %v458
      %v460 = vadd.f32 %v358, %v359
      %v461 = vrot.slane %v460, 4
      %v462 = vadd.f32 %v460, %v461
      %v463 = vrot.slane %v462, 2
      %v464 = vadd.f32 %v462, %v463
      %v465 = vrot.slane %v464, 1
      %v466 = vadd.f32 %v464, %v465
      %v467 = vadd.f32 %v360, %v361
      %v468 = vrot.slane %v467, 4
      %v469 = vadd.f32 %v467, %v468
      %v470 = vrot.slane %v469, 2
      %v471 = vadd.f32 %v469, %v470
      %v472 = vrot.slane %v471, 1
      %v473 = vadd.f32 %v471, %v472
      %v474 = vmul.f32 %v424, 0.0625
      %v475 = vmul.f32 %v431, 0.0625
      %v476 = vmul.f32 %v438, 0.0625
      %v477 = vmul.f32 %v445, 0.0625
      %v478 = vmul.f32 %v452, 0.0625
      %v479 = vmul.f32 %v459, 0.0625
      %v480 = vmul.f32 %v466, 0.0625
      %v481 = vmul.f32 %v473, 0.0625
      %v482 = vld [vmem:[%s2] sm:$0xff]
      %v483 = vld [vmem:[%s2 + $0x8] sm:$0xff]
      %v484 = vld [vmem:[%s2 + $0x10] sm:$0xff]
      %v485 = vld [vmem:[%s2 + $0x18] sm:$0xff]
      %v486 = vld [vmem:[%s2 + $0x20] sm:$0xff]
      %v487 = vld [vmem:[%s2 + $0x28] sm:$0xff]
      %v488 = vld [vmem:[%s2 + $0x30] sm:$0xff]
      %v489 = vld [vmem:[%s2 + $0x38] sm:$0xff]
      %v490 = vld [vmem:[%s2 + $0x40] sm:$0xff]
      %v491 = vld [vmem:[%s2 + $0x48] sm:$0xff]
      %v492 = vld [vmem:[%s2 + $0x50] sm:$0xff]
      %v493 = vld [vmem:[%s2 + $0x58] sm:$0xff]
      %v494 = vld [vmem:[%s2 + $0x60] sm:$0xff]
      %v495 = vld [vmem:[%s2 + $0x68] sm:$0xff]
      %v496 = vld [vmem:[%s2 + $0x70] sm:$0xff]
      %v497 = vld [vmem:[%s2 + $0x78] sm:$0xff]
      %498 = vmatpush.msra.mxu0 %v497
      %499 = vmatpush.msra.mxu0 %v496
      %500 = vmatpush.msra.mxu0 %v495
      %501 = vmatpush.msra.mxu0 %v494
      %502 = vmatpush.msra.mxu0 %v493
      %503 = vmatpush.msra.mxu0 %v492
      %504 = vmatpush.msra.mxu0 %v491
      %505 = vmatpush.msra.mxu0 %v490
      %506 = vmatpush.msra.mxu0 %v489
      %507 = vmatpush.msra.mxu0 %v488
      %508 = vmatpush.msra.mxu0 %v487
      %509 = vmatpush.msra.mxu0 %v486
      %510 = vmatpush.msra.mxu0 %v485
      %511 = vmatpush.msra.mxu0 %v484
      %512 = vmatpush.msra.mxu0 %v483
      %513 = vmatpush.msra.mxu0 %v482
      %514 = vmatmul.f32.gmra.mxu0 %v346
      %v515 = vpop.f32.mrf.mxu0
      %v516 = vadd.f32 0.0, %v515
      %517 = vmatmul.f32.gmra.mxu0 %v347
      %v518 = vpop.f32.mrf.mxu0
      %v519 = vadd.f32 0.0, %v518
      %520 = vmatmul.f32.gmra.mxu0 %v348
      %v521 = vpop.f32.mrf.mxu0
      %v522 = vadd.f32 0.0, %v521
      %523 = vmatmul.f32.gmra.mxu0 %v349
      %v524 = vpop.f32.mrf.mxu0
      %v525 = vadd.f32 0.0, %v524
      %526 = vmatmul.f32.gmra.mxu0 %v350
      %v527 = vpop.f32.mrf.mxu0
      %v528 = vadd.f32 0.0, %v527
      %529 = vmatmul.f32.gmra.mxu0 %v351
      %v530 = vpop.f32.mrf.mxu0
      %v531 = vadd.f32 0.0, %v530
      %532 = vmatmul.f32.gmra.mxu0 %v352
      %v533 = vpop.f32.mrf.mxu0
      %v534 = vadd.f32 0.0, %v533
      %535 = vmatmul.f32.gmra.mxu0 %v353
      %v536 = vpop.f32.mrf.mxu0
      %v537 = vadd.f32 0.0, %v536
      %538 = vmatmul.f32.gmra.mxu0 %v354
      %v539 = vpop.f32.mrf.mxu0
      %v540 = vadd.f32 0.0, %v539
      %541 = vmatmul.f32.gmra.mxu0 %v355
      %v542 = vpop.f32.mrf.mxu0
      %v543 = vadd.f32 0.0, %v542
      %544 = vmatmul.f32.gmra.mxu0 %v356
      %v545 = vpop.f32.mrf.mxu0
      %v546 = vadd.f32 0.0, %v545
      %547 = vmatmul.f32.gmra.mxu0 %v357
      %v548 = vpop.f32.mrf.mxu0
      %v549 = vadd.f32 0.0, %v548
      %550 = vmatmul.f32.gmra.mxu0 %v358
      %v551 = vpop.f32.mrf.mxu0
      %v552 = vadd.f32 0.0, %v551
      %553 = vmatmul.f32.gmra.mxu0 %v359
      %v554 = vpop.f32.mrf.mxu0
      %v555 = vadd.f32 0.0, %v554
      %556 = vmatmul.f32.gmra.mxu0 %v360
      %v557 = vpop.f32.mrf.mxu0
      %v558 = vadd.f32 0.0, %v557
      %559 = vmatmul.f32.gmra.mxu0 %v361
      %v560 = vpop.f32.mrf.mxu0
      %v561 = vadd.f32 0.0, %v560
      %562 = vdwg.mxu0
      %v563 = vperm.slane %v256, 0
      %564 = vmatpush.msra.mxu0 %v561
      %565 = vmatpush.msra.mxu0 %v558
      %566 = vmatpush.msra.mxu0 %v555
      %567 = vmatpush.msra.mxu0 %v552
      %568 = vmatpush.msra.mxu0 %v549
      %569 = vmatpush.msra.mxu0 %v546
      %570 = vmatpush.msra.mxu0 %v543
      %571 = vmatpush.msra.mxu0 %v540
      %572 = vmatpush.msra.mxu0 %v537
      %573 = vmatpush.msra.mxu0 %v534
      %574 = vmatpush.msra.mxu0 %v531
      %575 = vmatpush.msra.mxu0 %v528
      %576 = vmatpush.msra.mxu0 %v525
      %577 = vmatpush.msra.mxu0 %v522
      %578 = vmatpush.msra.mxu0 %v519
      %579 = vmatpush.msra.mxu0 %v516
      %580 = vmatmul.f32.gmra.mxu0 %v237
      %v581 = vpop.f32.mrf.mxu0
      %v582 = vadd.f32 %v563, %v581
      %583 = vmatmul.f32.gmra.mxu0 %v238
      %v584 = vpop.f32.mrf.mxu0
      %v585 = vadd.f32 %v563, %v584
      %586 = vmatmul.f32.gmra.mxu0 %v239
      %v587 = vpop.f32.mrf.mxu0
      %v588 = vadd.f32 %v563, %v587
      %589 = vmatmul.f32.gmra.mxu0 %v240
      %v590 = vpop.f32.mrf.mxu0
      %v591 = vadd.f32 %v563, %v590
      %592 = vmatmul.f32.gmra.mxu0 %v241
      %v593 = vpop.f32.mrf.mxu0
      %v594 = vadd.f32 %v563, %v593
      %595 = vmatmul.f32.gmra.mxu0 %v242
      %v596 = vpop.f32.mrf.mxu0
      %v597 = vadd.f32 %v563, %v596
      %598 = vmatmul.f32.gmra.mxu0 %v243
      %v599 = vpop.f32.mrf.mxu0
      %v600 = vadd.f32 %v563, %v599
      %601 = vmatmul.f32.gmra.mxu0 %v244
      %v602 = vpop.f32.mrf.mxu0
      %v603 = vadd.f32 %v563, %v602
      %604 = vmatmul.f32.gmra.mxu0 %v245
      %v605 = vpop.f32.mrf.mxu0
      %v606 = vadd.f32 %v563, %v605
      %607 = vmatmul.f32.gmra.mxu0 %v246
      %v608 = vpop.f32.mrf.mxu0
      %v609 = vadd.f32 %v563, %v608
      %610 = vmatmul.f32.gmra.mxu0 %v247
      %v611 = vpop.f32.mrf.mxu0
      %v612 = vadd.f32 %v563, %v611
      %613 = vmatmul.f32.gmra.mxu0 %v248
      %v614 = vpop.f32.mrf.mxu0
      %v615 = vadd.f32 %v563, %v614
      %616 = vmatmul.f32.gmra.mxu0 %v249
      %v617 = vpop.f32.mrf.mxu0
      %v618 = vadd.f32 %v563, %v617
      %619 = vmatmul.f32.gmra.mxu0 %v250
      %v620 = vpop.f32.mrf.mxu0
      %v621 = vadd.f32 %v563, %v620
      %622 = vmatmul.f32.gmra.mxu0 %v251
      %v623 = vpop.f32.mrf.mxu0
      %v624 = vadd.f32 %v563, %v623
      %625 = vmatmul.f32.gmra.mxu0 %v252
      %v626 = vpop.f32.mrf.mxu0
      %v627 = vadd.f32 %v563, %v626
      %628 = vdwg.mxu0
      %v629 = vmax.f32 %v582, 0.0
      %v630 = vmax.f32 %v585, 0.0
      %v631 = vmax.f32 %v588, 0.0
      %v632 = vmax.f32 %v591, 0.0
      %v633 = vmax.f32 %v594, 0.0
      %v634 = vmax.f32 %v597, 0.0
      %v635 = vmax.f32 %v600, 0.0
      %v636 = vmax.f32 %v603, 0.0
      %v637 = vmax.f32 %v606, 0.0
      %v638 = vmax.f32 %v609, 0.0
      %v639 = vmax.f32 %v612, 0.0
      %v640 = vmax.f32 %v615, 0.0
      %v641 = vmax.f32 %v618, 0.0
      %v642 = vmax.f32 %v621, 0.0
      %v643 = vmax.f32 %v624, 0.0
      %v644 = vmax.f32 %v627, 0.0
      %v645 = vmax.f32 %v629, %v630
      %v646 = vrot.slane %v645, 4
      %v647 = vmax.f32 %v645, %v646
      %v648 = vrot.slane %v647, 2
      %v649 = vmax.f32 %v647, %v648
      %v650 = vrot.slane %v649, 1
      %v651 = vmax.f32 %v649, %v650
      %v652 = vmax.f32 %v631, %v632
      %v653 = vrot.slane %v652, 4
      %v654 = vmax.f32 %v652, %v653
      %v655 = vrot.slane %v654, 2
      %v656 = vmax.f32 %v654, %v655
      %v657 = vrot.slane %v656, 1
      %v658 = vmax.f32 %v656, %v657
      %v659 = vmax.f32 %v633, %v634
      %v660 = vrot.slane %v659, 4
      %v661 = vmax.f32 %v659, %v660
      %v662 = vrot.slane %v661, 2
      %v663 = vmax.f32 %v661, %v662
      %v664 = vrot.slane %v663, 1
      %v665 = vmax.f32 %v663, %v664
      %v666 = vmax.f32 %v635, %v636
      %v667 = vrot.slane %v666, 4
      %v668 = vmax.f32 %v666, %v667
      %v669 = vrot.slane %v668, 2
      %v670 = vmax.f32 %v668, %v669
      %v671 = vrot.slane %v670, 1
      %v672 = vmax.f32 %v670, %v671
      %v673 = vmax.f32 %v637, %v638
      %v674 = vrot.slane %v673, 4
      %v675 = vmax.f32 %v673, %v674
      %v676 = vrot.slane %v675, 2
      %v677 = vmax.f32 %v675, %v676
      %v678 = vrot.slane %v677, 1
      %v679 = vmax.f32 %v677, %v678
      %v680 = vmax.f32 %v639, %v640
      %v681 = vrot.slane %v680, 4
      %v682 = vmax.f32 %v680, %v681
      %v683 = vrot.slane %v682, 2
      %v684 = vmax.f32 %v682, %v683
      %v685 = vrot.slane %v684, 1
      %v686 = vmax.f32 %v684, %v685
      %v687 = vmax.f32 %v641, %v642
      %v688 = vrot.slane %v687, 4
      %v689 = vmax.f32 %v687, %v688
      %v690 = vrot.slane %v689, 2
      %v691 = vmax.f32 %v689, %v690
      %v692 = vrot.slane %v691, 1
      %v693 = vmax.f32 %v691, %v692
      %v694 = vmax.f32 %v643, %v644
      %v695 = vrot.slane %v694, 4
      %v696 = vmax.f32 %v694, %v695
      %v697 = vrot.slane %v696, 2
      %v698 = vmax.f32 %v696, %v697
      %v699 = vrot.slane %v698, 1
      %v700 = vmax.f32 %v698, %v699
      %v701 = vadd.f32 %v629, %v630
      %v702 = vrot.slane %v701, 4
      %v703 = vadd.f32 %v701, %v702
      %v704 = vrot.slane %v703, 2
      %v705 = vadd.f32 %v703, %v704
      %v706 = vrot.slane %v705, 1
      %v707 = vadd.f32 %v705, %v706
      %v708 = vadd.f32 %v631, %v632
      %v709 = vrot.slane %v708, 4
      %v710 = vadd.f32 %v708, %v709
      %v711 = vrot.slane %v710, 2
      %v712 = vadd.f32 %v710, %v711
      %v713 = vrot.slane %v712, 1
      %v714 = vadd.f32 %v712, %v713
      %v715 = vadd.f32 %v633, %v634
      %v716 = vrot.slane %v715, 4
      %v717 = vadd.f32 %v715, %v716
      %v718 = vrot.slane %v717, 2
      %v719 = vadd.f32 %v717, %v718
      %v720 = vrot.slane %v719, 1
      %v721 = vadd.f32 %v719, %v720
      %v722 = vadd.f32 %v635, %v636
      %v723 = vrot.slane %v722, 4
      %v724 = vadd.f32 %v722, %v723
      %v725 = vrot.slane %v724, 2
      %v726 = vadd.f32 %v724, %v725
      %v727 = vrot.slane %v726, 1
      %v728 = vadd.f32 %v726, %v727
      %v729 = vadd.f32 %v637, %v638
      %v730 = vrot.slane %v729, 4
      %v731 = vadd.f32 %v729, %v730
      %v732 = vrot.slane %v731, 2
      %v733 = vadd.f32 %v731, %v732
      %v734 = vrot.slane %v733, 1
      %v735 = vadd.f32 %v733, %v734
      %v736 = vadd.f32 %v639, %v640
      %v737 = vrot.slane %v736, 4
      %v738 = vadd.f32 %v736, %v737
      %v739 = vrot.slane %v738, 2
      %v740 = vadd.f32 %v738, %v739
      %v741 = vrot.slane %v740, 1
      %v742 = vadd.f32 %v740, %v741
      %v743 = vadd.f32 %v641, %v642
      %v744 = vrot.slane %v743, 4
      %v745 = vadd.f32 %v743, %v744
      %v746 = vrot.slane %v745, 2
      %v747 = vadd.f32 %v745, %v746
      %v748 = vrot.slane %v747, 1
      %v749 = vadd.f32 %v747, %v748
      %v750 = vadd.f32 %v643, %v644
      %v751 = vrot.slane %v750, 4
      %v752 = vadd.f32 %v750, %v751
      %v753 = vrot.slane %v752, 2
      %v754 = vadd.f32 %v752, %v753
      %v755 = vrot.slane %v754, 1
      %v756 = vadd.f32 %v754, %v755
      %v757 = vmul.f32 %v707, 0.0625
      %v758 = vmul.f32 %v714, 0.0625
      %v759 = vmul.f32 %v721, 0.0625
      %v760 = vmul.f32 %v728, 0.0625
      %v761 = vmul.f32 %v735, 0.0625
      %v762 = vmul.f32 %v742, 0.0625
      %v763 = vmul.f32 %v749, 0.0625
      %v764 = vmul.f32 %v756, 0.0625
      %v765 = vadd.f32 %v368, %v651
      %v766 = vadd.f32 %v375, %v658
      %v767 = vadd.f32 %v382, %v665
      %v768 = vadd.f32 %v389, %v672
      %v769 = vadd.f32 %v396, %v679
      %v770 = vadd.f32 %v403, %v686
      %v771 = vadd.f32 %v410, %v693
      %v772 = vadd.f32 %v417, %v700
      %v773 = vadd.f32 %v474, %v757
      %v774 = vadd.f32 %v475, %v758
      %v775 = vadd.f32 %v476, %v759
      %v776 = vadd.f32 %v477, %v760
      %v777 = vadd.f32 %v478, %v761
      %v778 = vadd.f32 %v479, %v762
      %v779 = vadd.f32 %v480, %v763
      %v780 = vadd.f32 %v481, %v764
      %s781 = scalar_lea.vmem %s2, 128
      %v782 = vld [vmem:[%s781] sm:$0xff]
      %v783 = vld [vmem:[%s781 + $0x8] sm:$0xff]
      %v784 = vld [vmem:[%s781 + $0x10] sm:$0xff]
      %v785 = vld [vmem:[%s781 + $0x18] sm:$0xff]
      %v786 = vld [vmem:[%s781 + $0x20] sm:$0xff]
      %v787 = vld [vmem:[%s781 + $0x28] sm:$0xff]
      %v788 = vld [vmem:[%s781 + $0x30] sm:$0xff]
      %v789 = vld [vmem:[%s781 + $0x38] sm:$0xff]
      %v790 = vld [vmem:[%s781 + $0x40] sm:$0xff]
      %v791 = vld [vmem:[%s781 + $0x48] sm:$0xff]
      %v792 = vld [vmem:[%s781 + $0x50] sm:$0xff]
      %v793 = vld [vmem:[%s781 + $0x58] sm:$0xff]
      %v794 = vld [vmem:[%s781 + $0x60] sm:$0xff]
      %v795 = vld [vmem:[%s781 + $0x68] sm:$0xff]
      %v796 = vld [vmem:[%s781 + $0x70] sm:$0xff]
      %v797 = vld [vmem:[%s781 + $0x78] sm:$0xff]
      %798 = vmatpush.msra.mxu0 %v797
      %799 = vmatpush.msra.mxu0 %v796
      %800 = vmatpush.msra.mxu0 %v795
      %801 = vmatpush.msra.mxu0 %v794
      %802 = vmatpush.msra.mxu0 %v793
      %803 = vmatpush.msra.mxu0 %v792
      %804 = vmatpush.msra.mxu0 %v791
      %805 = vmatpush.msra.mxu0 %v790
      %806 = vmatpush.msra.mxu0 %v789
      %807 = vmatpush.msra.mxu0 %v788
      %808 = vmatpush.msra.mxu0 %v787
      %809 = vmatpush.msra.mxu0 %v786
      %810 = vmatpush.msra.mxu0 %v785
      %811 = vmatpush.msra.mxu0 %v784
      %812 = vmatpush.msra.mxu0 %v783
      %813 = vmatpush.msra.mxu0 %v782
      %814 = vmatmul.f32.gmra.mxu0 %v629
      %v815 = vpop.f32.mrf.mxu0
      %v816 = vadd.f32 0.0, %v815
      %817 = vmatmul.f32.gmra.mxu0 %v630
      %v818 = vpop.f32.mrf.mxu0
      %v819 = vadd.f32 0.0, %v818
      %820 = vmatmul.f32.gmra.mxu0 %v631
      %v821 = vpop.f32.mrf.mxu0
      %v822 = vadd.f32 0.0, %v821
      %823 = vmatmul.f32.gmra.mxu0 %v632
      %v824 = vpop.f32.mrf.mxu0
      %v825 = vadd.f32 0.0, %v824
      %826 = vmatmul.f32.gmra.mxu0 %v633
      %v827 = vpop.f32.mrf.mxu0
      %v828 = vadd.f32 0.0, %v827
      %829 = vmatmul.f32.gmra.mxu0 %v634
      %v830 = vpop.f32.mrf.mxu0
      %v831 = vadd.f32 0.0, %v830
      %832 = vmatmul.f32.gmra.mxu0 %v635
      %v833 = vpop.f32.mrf.mxu0
      %v834 = vadd.f32 0.0, %v833
      %835 = vmatmul.f32.gmra.mxu0 %v636
      %v836 = vpop.f32.mrf.mxu0
      %v837 = vadd.f32 0.0, %v836
      %838 = vmatmul.f32.gmra.mxu0 %v637
      %v839 = vpop.f32.mrf.mxu0
      %v840 = vadd.f32 0.0, %v839
      %841 = vmatmul.f32.gmra.mxu0 %v638
      %v842 = vpop.f32.mrf.mxu0
      %v843 = vadd.f32 0.0, %v842
      %844 = vmatmul.f32.gmra.mxu0 %v639
      %v845 = vpop.f32.mrf.mxu0
      %v846 = vadd.f32 0.0, %v845
      %847 = vmatmul.f32.gmra.mxu0 %v640
      %v848 = vpop.f32.mrf.mxu0
      %v849 = vadd.f32 0.0, %v848
      %850 = vmatmul.f32.gmra.mxu0 %v641
      %v851 = vpop.f32.mrf.mxu0
      %v852 = vadd.f32 0.0, %v851
      %853 = vmatmul.f32.gmra.mxu0 %v642
      %v854 = vpop.f32.mrf.mxu0
      %v855 = vadd.f32 0.0, %v854
      %856 = vmatmul.f32.gmra.mxu0 %v643
      %v857 = vpop.f32.mrf.mxu0
      %v858 = vadd.f32 0.0, %v857
      %859 = vmatmul.f32.gmra.mxu0 %v644
      %v860 = vpop.f32.mrf.mxu0
      %v861 = vadd.f32 0.0, %v860
      %862 = vdwg.mxu0
      %v863 = vperm.slane %v257, 0
      %864 = vmatpush.msra.mxu0 %v861
      %865 = vmatpush.msra.mxu0 %v858
      %866 = vmatpush.msra.mxu0 %v855
      %867 = vmatpush.msra.mxu0 %v852
      %868 = vmatpush.msra.mxu0 %v849
      %869 = vmatpush.msra.mxu0 %v846
      %870 = vmatpush.msra.mxu0 %v843
      %871 = vmatpush.msra.mxu0 %v840
      %872 = vmatpush.msra.mxu0 %v837
      %873 = vmatpush.msra.mxu0 %v834
      %874 = vmatpush.msra.mxu0 %v831
      %875 = vmatpush.msra.mxu0 %v828
      %876 = vmatpush.msra.mxu0 %v825
      %877 = vmatpush.msra.mxu0 %v822
      %878 = vmatpush.msra.mxu0 %v819
      %879 = vmatpush.msra.mxu0 %v816
      %880 = vmatmul.f32.gmra.mxu0 %v237
      %v881 = vpop.f32.mrf.mxu0
      %v882 = vadd.f32 %v863, %v881
      %883 = vmatmul.f32.gmra.mxu0 %v238
      %v884 = vpop.f32.mrf.mxu0
      %v885 = vadd.f32 %v863, %v884
      %886 = vmatmul.f32.gmra.mxu0 %v239
      %v887 = vpop.f32.mrf.mxu0
      %v888 = vadd.f32 %v863, %v887
      %889 = vmatmul.f32.gmra.mxu0 %v240
      %v890 = vpop.f32.mrf.mxu0
      %v891 = vadd.f32 %v863, %v890
      %892 = vmatmul.f32.gmra.mxu0 %v241
      %v893 = vpop.f32.mrf.mxu0
      %v894 = vadd.f32 %v863, %v893
      %895 = vmatmul.f32.gmra.mxu0 %v242
      %v896 = vpop.f32.mrf.mxu0
      %v897 = vadd.f32 %v863, %v896
      %898 = vmatmul.f32.gmra.mxu0 %v243
      %v899 = vpop.f32.mrf.mxu0
      %v900 = vadd.f32 %v863, %v899
      %901 = vmatmul.f32.gmra.mxu0 %v244
      %v902 = vpop.f32.mrf.mxu0
      %v903 = vadd.f32 %v863, %v902
      %904 = vmatmul.f32.gmra.mxu0 %v245
      %v905 = vpop.f32.mrf.mxu0
      %v906 = vadd.f32 %v863, %v905
      %907 = vmatmul.f32.gmra.mxu0 %v246
      %v908 = vpop.f32.mrf.mxu0
      %v909 = vadd.f32 %v863, %v908
      %910 = vmatmul.f32.gmra.mxu0 %v247
      %v911 = vpop.f32.mrf.mxu0
      %v912 = vadd.f32 %v863, %v911
      %913 = vmatmul.f32.gmra.mxu0 %v248
      %v914 = vpop.f32.mrf.mxu0
      %v915 = vadd.f32 %v863, %v914
      %916 = vmatmul.f32.gmra.mxu0 %v249
      %v917 = vpop.f32.mrf.mxu0
      %v918 = vadd.f32 %v863, %v917
      %919 = vmatmul.f32.gmra.mxu0 %v250
      %v920 = vpop.f32.mrf.mxu0
      %v921 = vadd.f32 %v863, %v920
      %922 = vmatmul.f32.gmra.mxu0 %v251
      %v923 = vpop.f32.mrf.mxu0
      %v924 = vadd.f32 %v863, %v923
      %925 = vmatmul.f32.gmra.mxu0 %v252
      %v926 = vpop.f32.mrf.mxu0
      %v927 = vadd.f32 %v863, %v926
      %928 = vdwg.mxu0
      %v929 = vmax.f32 %v882, 0.0
      %v930 = vmax.f32 %v885, 0.0
      %v931 = vmax.f32 %v888, 0.0
      %v932 = vmax.f32 %v891, 0.0
      %v933 = vmax.f32 %v894, 0.0
      %v934 = vmax.f32 %v897, 0.0
      %v935 = vmax.f32 %v900, 0.0
      %v936 = vmax.f32 %v903, 0.0
      %v937 = vmax.f32 %v906, 0.0
      %v938 = vmax.f32 %v909, 0.0
      %v939 = vmax.f32 %v912, 0.0
      %v940 = vmax.f32 %v915, 0.0
      %v941 = vmax.f32 %v918, 0.0
      %v942 = vmax.f32 %v921, 0.0
      %v943 = vmax.f32 %v924, 0.0
      %v944 = vmax.f32 %v927, 0.0
      %v945 = vmax.f32 %v929, %v930
      %v946 = vrot.slane %v945, 4
      %v947 = vmax.f32 %v945, %v946
      %v948 = vrot.slane %v947, 2
      %v949 = vmax.f32 %v947, %v948
      %v950 = vrot.slane %v949, 1
      %v951 = vmax.f32 %v949, %v950
      %v952 = vmax.f32 %v931, %v932
      %v953 = vrot.slane %v952, 4
      %v954 = vmax.f32 %v952, %v953
      %v955 = vrot.slane %v954, 2
      %v956 = vmax.f32 %v954, %v955
      %v957 = vrot.slane %v956, 1
      %v958 = vmax.f32 %v956, %v957
      %v959 = vmax.f32 %v933, %v934
      %v960 = vrot.slane %v959, 4
      %v961 = vmax.f32 %v959, %v960
      %v962 = vrot.slane %v961, 2
      %v963 = vmax.f32 %v961, %v962
      %v964 = vrot.slane %v963, 1
      %v965 = vmax.f32 %v963, %v964
      %v966 = vmax.f32 %v935, %v936
      %v967 = vrot.slane %v966, 4
      %v968 = vmax.f32 %v966, %v967
      %v969 = vrot.slane %v968, 2
      %v970 = vmax.f32 %v968, %v969
      %v971 = vrot.slane %v970, 1
      %v972 = vmax.f32 %v970, %v971
      %v973 = vmax.f32 %v937, %v938
      %v974 = vrot.slane %v973, 4
      %v975 = vmax.f32 %v973, %v974
      %v976 = vrot.slane %v975, 2
      %v977 = vmax.f32 %v975, %v976
      %v978 = vrot.slane %v977, 1
      %v979 = vmax.f32 %v977, %v978
      %v980 = vmax.f32 %v939, %v940
      %v981 = vrot.slane %v980, 4
      %v982 = vmax.f32 %v980, %v981
      %v983 = vrot.slane %v982, 2
      %v984 = vmax.f32 %v982, %v983
      %v985 = vrot.slane %v984, 1
      %v986 = vmax.f32 %v984, %v985
      %v987 = vmax.f32 %v941, %v942
      %v988 = vrot.slane %v987, 4
      %v989 = vmax.f32 %v987, %v988
      %v990 = vrot.slane %v989, 2
      %v991 = vmax.f32 %v989, %v990
      %v992 = vrot.slane %v991, 1
      %v993 = vmax.f32 %v991, %v992
      %v994 = vmax.f32 %v943, %v944
      %v995 = vrot.slane %v994, 4
      %v996 = vmax.f32 %v994, %v995
      %v997 = vrot.slane %v996, 2
      %v998 = vmax.f32 %v996, %v997
      %v999 = vrot.slane %v998, 1
      %v1000 = vmax.f32 %v998, %v999
      %v1001 = vadd.f32 %v929, %v930
      %v1002 = vrot.slane %v1001, 4
      %v1003 = vadd.f32 %v1001, %v1002
      %v1004 = vrot.slane %v1003, 2
      %v1005 = vadd.f32 %v1003, %v1004
      %v1006 = vrot.slane %v1005, 1
      %v1007 = vadd.f32 %v1005, %v1006
      %v1008 = vadd.f32 %v931, %v932
      %v1009 = vrot.slane %v1008, 4
      %v1010 = vadd.f32 %v1008, %v1009
      %v1011 = vrot.slane %v1010, 2
      %v1012 = vadd.f32 %v1010, %v1011
      %v1013 = vrot.slane %v1012, 1
      %v1014 = vadd.f32 %v1012, %v1013
      %v1015 = vadd.f32 %v933, %v934
      %v1016 = vrot.slane %v1015, 4
      %v1017 = vadd.f32 %v1015, %v1016
      %v1018 = vrot.slane %v1017, 2
      %v1019 = vadd.f32 %v1017, %v1018
      %v1020 = vrot.slane %v1019, 1
      %v1021 = vadd.f32 %v1019, %v1020
      %v1022 = vadd.f32 %v935, %v936
      %v1023 = vrot.slane %v1022, 4
      %v1024 = vadd.f32 %v1022, %v1023
      %v1025 = vrot.slane %v1024, 2
      %v1026 = vadd.f32 %v1024, %v1025
      %v1027 = vrot.slane %v1026, 1
      %v1028 = vadd.f32 %v1026, %v1027
      %v1029 = vadd.f32 %v937, %v938
      %v1030 = vrot.slane %v1029, 4
      %v1031 = vadd.f32 %v1029, %v1030
      %v1032 = vrot.slane %v1031, 2
      %v1033 = vadd.f32 %v1031, %v1032
      %v1034 = vrot.slane %v1033, 1
      %v1035 = vadd.f32 %v1033, %v1034
      %v1036 = vadd.f32 %v939, %v940
      %v1037 = vrot.slane %v1036, 4
      %v1038 = vadd.f32 %v1036, %v1037
      %v1039 = vrot.slane %v1038, 2
      %v1040 = vadd.f32 %v1038, %v1039
      %v1041 = vrot.slane %v1040, 1
      %v1042 = vadd.f32 %v1040, %v1041
      %v1043 = vadd.f32 %v941, %v942
      %v1044 = vrot.slane %v1043, 4
      %v1045 = vadd.f32 %v1043, %v1044
      %v1046 = vrot.slane %v1045, 2
      %v1047 = vadd.f32 %v1045, %v1046
      %v1048 = vrot.slane %v1047, 1
      %v1049 = vadd.f32 %v1047, %v1048
      %v1050 = vadd.f32 %v943, %v944
      %v1051 = vrot.slane %v1050, 4
      %v1052 = vadd.f32 %v1050, %v1051
      %v1053 = vrot.slane %v1052, 2
      %v1054 = vadd.f32 %v1052, %v1053
      %v1055 = vrot.slane %v1054, 1
      %v1056 = vadd.f32 %v1054, %v1055
      %v1057 = vmul.f32 %v1007, 0.0625
      %v1058 = vmul.f32 %v1014, 0.0625
      %v1059 = vmul.f32 %v1021, 0.0625
      %v1060 = vmul.f32 %v1028, 0.0625
      %v1061 = vmul.f32 %v1035, 0.0625
      %v1062 = vmul.f32 %v1042, 0.0625
      %v1063 = vmul.f32 %v1049, 0.0625
      %v1064 = vmul.f32 %v1056, 0.0625
      %v1065 = vadd.f32 %v765, %v951
      %v1066 = vadd.f32 %v766, %v958
      %v1067 = vadd.f32 %v767, %v965
      %v1068 = vadd.f32 %v768, %v972
      %v1069 = vadd.f32 %v769, %v979
      %v1070 = vadd.f32 %v770, %v986
      %v1071 = vadd.f32 %v771, %v993
      %v1072 = vadd.f32 %v772, %v1000
      %v1073 = vadd.f32 %v773, %v1057
      %v1074 = vadd.f32 %v774, %v1058
      %v1075 = vadd.f32 %v775, %v1059
      %v1076 = vadd.f32 %v776, %v1060
      %v1077 = vadd.f32 %v777, %v1061
      %v1078 = vadd.f32 %v778, %v1062
      %v1079 = vadd.f32 %v779, %v1063
      %v1080 = vadd.f32 %v780, %v1064
      %v1081 = vld [vmem:[%s3] sm:$0xff]
      %v1082 = vld [vmem:[%s3 + $0x8] sm:$0xff]
      %v1083 = vld [vmem:[%s3 + $0x10] sm:$0xff]
      %v1084 = vld [vmem:[%s3 + $0x18] sm:$0xff]
      %v1085 = vld [vmem:[%s3 + $0x20] sm:$0xff]
      %v1086 = vld [vmem:[%s3 + $0x28] sm:$0xff]
      %v1087 = vld [vmem:[%s3 + $0x30] sm:$0xff]
      %v1088 = vld [vmem:[%s3 + $0x38] sm:$0xff]
      %v1089 = vld [vmem:[%s3 + $0x40] sm:$0xff]
      %v1090 = vld [vmem:[%s3 + $0x48] sm:$0xff]
      %v1091 = vld [vmem:[%s3 + $0x50] sm:$0xff]
      %v1092 = vld [vmem:[%s3 + $0x58] sm:$0xff]
      %v1093 = vld [vmem:[%s3 + $0x60] sm:$0xff]
      %v1094 = vld [vmem:[%s3 + $0x68] sm:$0xff]
      %v1095 = vld [vmem:[%s3 + $0x70] sm:$0xff]
      %v1096 = vld [vmem:[%s3 + $0x78] sm:$0xff]
      %s1097 = scalar_lea.vmem %s3, 128
      %v1098 = vld [vmem:[%s1097] sm:$0xff]
      %v1099 = vld [vmem:[%s1097 + $0x8] sm:$0xff]
      %v1100 = vld [vmem:[%s1097 + $0x10] sm:$0xff]
      %v1101 = vld [vmem:[%s1097 + $0x18] sm:$0xff]
      %v1102 = vld [vmem:[%s1097 + $0x20] sm:$0xff]
      %v1103 = vld [vmem:[%s1097 + $0x28] sm:$0xff]
      %v1104 = vld [vmem:[%s1097 + $0x30] sm:$0xff]
      %v1105 = vld [vmem:[%s1097 + $0x38] sm:$0xff]
      %v1106 = vld [vmem:[%s1097 + $0x40] sm:$0xff]
      %v1107 = vld [vmem:[%s1097 + $0x48] sm:$0xff]
      %v1108 = vld [vmem:[%s1097 + $0x50] sm:$0xff]
      %v1109 = vld [vmem:[%s1097 + $0x58] sm:$0xff]
      %v1110 = vld [vmem:[%s1097 + $0x60] sm:$0xff]
      %v1111 = vld [vmem:[%s1097 + $0x68] sm:$0xff]
      %v1112 = vld [vmem:[%s1097 + $0x70] sm:$0xff]
      %v1113 = vld [vmem:[%s1097 + $0x78] sm:$0xff]
      %vm1122 = vcmask 1041409
      %v1123 = vsel %vm1122, %v1074, %v1073
      %vm1124 = vcmask 1042434
      %v1125 = vsel %vm1124, %v1075, %v1123
      %vm1126 = vcmask 1043459
      %v1127 = vsel %vm1126, %v1076, %v1125
      %vm1128 = vcmask 1044484
      %v1129 = vsel %vm1128, %v1077, %v1127
      %vm1130 = vcmask 1045509
      %v1131 = vsel %vm1130, %v1078, %v1129
      %vm1132 = vcmask 1046534
      %v1133 = vsel %vm1132, %v1079, %v1131
      %vm1134 = vcmask 1047559
      %v1135 = vsel %vm1134, %v1080, %v1133
      %1137 = vmatpush.msra.mxu0 %v1113
      %1138 = vmatpush.msra.mxu0 %v1112
      %1139 = vmatpush.msra.mxu0 %v1111
      %1140 = vmatpush.msra.mxu0 %v1110
      %1141 = vmatpush.msra.mxu0 %v1109
      %1142 = vmatpush.msra.mxu0 %v1108
      %1143 = vmatpush.msra.mxu0 %v1107
      %1144 = vmatpush.msra.mxu0 %v1106
      %1145 = vmatpush.msra.mxu0 %v1105
      %1146 = vmatpush.msra.mxu0 %v1104
      %1147 = vmatpush.msra.mxu0 %v1103
      %1148 = vmatpush.msra.mxu0 %v1102
      %1149 = vmatpush.msra.mxu0 %v1101
      %1150 = vmatpush.msra.mxu0 %v1100
      %1151 = vmatpush.msra.mxu0 %v1099
      %1152 = vmatpush.msra.mxu0 %v1098
      %1153 = vmatmul.f32.gmra.mxu0 %v1135
      %v1154 = vpop.f32.mrf.mxu0
      %v1155 = vadd.f32 0.0, %v1154
      %1156 = vdwg.mxu0
      %v1165 = vsel %vm1122, %v1066, %v1065
      %v1166 = vsel %vm1124, %v1067, %v1165
      %v1167 = vsel %vm1126, %v1068, %v1166
      %v1168 = vsel %vm1128, %v1069, %v1167
      %v1169 = vsel %vm1130, %v1070, %v1168
      %v1170 = vsel %vm1132, %v1071, %v1169
      %v1171 = vsel %vm1134, %v1072, %v1170
      %1173 = vmatpush.msra.mxu0 %v1096
      %1174 = vmatpush.msra.mxu0 %v1095
      %1175 = vmatpush.msra.mxu0 %v1094
      %1176 = vmatpush.msra.mxu0 %v1093
      %1177 = vmatpush.msra.mxu0 %v1092
      %1178 = vmatpush.msra.mxu0 %v1091
      %1179 = vmatpush.msra.mxu0 %v1090
      %1180 = vmatpush.msra.mxu0 %v1089
      %1181 = vmatpush.msra.mxu0 %v1088
      %1182 = vmatpush.msra.mxu0 %v1087
      %1183 = vmatpush.msra.mxu0 %v1086
      %1184 = vmatpush.msra.mxu0 %v1085
      %1185 = vmatpush.msra.mxu0 %v1084
      %1186 = vmatpush.msra.mxu0 %v1083
      %1187 = vmatpush.msra.mxu0 %v1082
      %1188 = vmatpush.msra.mxu0 %v1081
      %1189 = vmatmul.f32.gmra.mxu0 %v1171
      %v1190 = vpop.f32.mrf.mxu0
      %v1191 = vadd.f32 %v1155, %v1190
      %1192 = vdwg.mxu0
      %v1193 = vperm.slane %v258, 0
      %v1194 = vadd.f32 %v1191, %v1193
      %v1195 = vmax.f32 %v1194, 0.0
      %s1196 = scalar_lea.vmem %s3, 256
      %v1197 = vld [vmem:[%s1196] sm:$0xff]
      %v1198 = vld [vmem:[%s1196 + $0x8] sm:$0xff]
      %v1199 = vld [vmem:[%s1196 + $0x10] sm:$0xff]
      %v1200 = vld [vmem:[%s1196 + $0x18] sm:$0xff]
      %v1201 = vld [vmem:[%s1196 + $0x20] sm:$0xff]
      %v1202 = vld [vmem:[%s1196 + $0x28] sm:$0xff]
      %v1203 = vld [vmem:[%s1196 + $0x30] sm:$0xff]
      %v1204 = vld [vmem:[%s1196 + $0x38] sm:$0xff]
      %v1205 = vld [vmem:[%s1196 + $0x40] sm:$0xff]
      %v1206 = vld [vmem:[%s1196 + $0x48] sm:$0xff]
      %v1207 = vld [vmem:[%s1196 + $0x50] sm:$0xff]
      %v1208 = vld [vmem:[%s1196 + $0x58] sm:$0xff]
      %v1209 = vld [vmem:[%s1196 + $0x60] sm:$0xff]
      %v1210 = vld [vmem:[%s1196 + $0x68] sm:$0xff]
      %v1211 = vld [vmem:[%s1196 + $0x70] sm:$0xff]
      %v1212 = vld [vmem:[%s1196 + $0x78] sm:$0xff]
      %v1213 = vperm.slane %v259, 0
      %1214 = vmatpush.msra.mxu0 %v1212
      %1215 = vmatpush.msra.mxu0 %v1211
      %1216 = vmatpush.msra.mxu0 %v1210
      %1217 = vmatpush.msra.mxu0 %v1209
      %1218 = vmatpush.msra.mxu0 %v1208
      %1219 = vmatpush.msra.mxu0 %v1207
      %1220 = vmatpush.msra.mxu0 %v1206
      %1221 = vmatpush.msra.mxu0 %v1205
      %1222 = vmatpush.msra.mxu0 %v1204
      %1223 = vmatpush.msra.mxu0 %v1203
      %1224 = vmatpush.msra.mxu0 %v1202
      %1225 = vmatpush.msra.mxu0 %v1201
      %1226 = vmatpush.msra.mxu0 %v1200
      %1227 = vmatpush.msra.mxu0 %v1199
      %1228 = vmatpush.msra.mxu0 %v1198
      %1229 = vmatpush.msra.mxu0 %v1197
      %1230 = vmatmul.f32.gmra.mxu0 %v1195
      %v1231 = vpop.f32.mrf.mxu0
      %v1232 = vadd.f32 %v1213, %v1231
      %1233 = vdwg.mxu0
      %v1234 = vmax.f32 %v1232, 0.0
      %s1235 = scalar_lea.vmem %s3, 384
      %v1236 = vld [vmem:[%s1235] sm:$0xff]
      %v1237 = vld [vmem:[%s1235 + $0x8] sm:$0xff]
      %v1238 = vld [vmem:[%s1235 + $0x10] sm:$0xff]
      %v1239 = vld [vmem:[%s1235 + $0x18] sm:$0xff]
      %v1240 = vld [vmem:[%s1235 + $0x20] sm:$0xff]
      %v1241 = vld [vmem:[%s1235 + $0x28] sm:$0xff]
      %v1242 = vld [vmem:[%s1235 + $0x30] sm:$0xff]
      %v1243 = vld [vmem:[%s1235 + $0x38] sm:$0xff]
      %v1244 = vld [vmem:[%s1235 + $0x40] sm:$0xff]
      %v1245 = vld [vmem:[%s1235 + $0x48] sm:$0xff]
      %v1246 = vld [vmem:[%s1235 + $0x50] sm:$0xff]
      %v1247 = vld [vmem:[%s1235 + $0x58] sm:$0xff]
      %v1248 = vld [vmem:[%s1235 + $0x60] sm:$0xff]
      %v1249 = vld [vmem:[%s1235 + $0x68] sm:$0xff]
      %v1250 = vld [vmem:[%s1235 + $0x70] sm:$0xff]
      %v1251 = vld [vmem:[%s1235 + $0x78] sm:$0xff]
      %v1252 = vperm.slane %v260, 0
      %1253 = vmatpush.msra.mxu0 %v1251
      %1254 = vmatpush.msra.mxu0 %v1250
      %1255 = vmatpush.msra.mxu0 %v1249
      %1256 = vmatpush.msra.mxu0 %v1248
      %1257 = vmatpush.msra.mxu0 %v1247
      %1258 = vmatpush.msra.mxu0 %v1246
      %1259 = vmatpush.msra.mxu0 %v1245
      %1260 = vmatpush.msra.mxu0 %v1244
      %1261 = vmatpush.msra.mxu0 %v1243
      %1262 = vmatpush.msra.mxu0 %v1242
      %1263 = vmatpush.msra.mxu0 %v1241
      %1264 = vmatpush.msra.mxu0 %v1240
      %1265 = vmatpush.msra.mxu0 %v1239
      %1266 = vmatpush.msra.mxu0 %v1238
      %1267 = vmatpush.msra.mxu0 %v1237
      %1268 = vmatpush.msra.mxu0 %v1236
      %1269 = vmatmul.f32.gmra.mxu0 %v1234
      %v1270 = vpop.f32.mrf.mxu0
      %v1271 = vadd.f32 %v1252, %v1270
      %1272 = vdwg.mxu0
      %v1273 = vlaneseq
      %v1274 = vand.u32 %v1273, 127
      %vm1275 = vcmp.lt.s32.totalorder %v1274, 5
      %v1276 = vsel %vm1275, %v1271, -1e+30
      %1277 = vmax.xlane.f32.xlu0 %v1276
      %v1278 = vpop.xlane.xlu0 %1277
      %v1279 = vsub.f32 %v1276, %v1278
      %v1280 = vmul.f32 %v1279, 1.442695
      %v1281 = vpow.pop %v1280
      %1282 = vadd.xlane.f32.xlu0 %v1281
      %v1283 = vpop.xlane.xlu0 %1282
      %v1284 = vlog2.pop %v1283
      %v1285 = vmul.f32 %v1284, 0.6931472
      %v1286 = vadd.f32 %v1278, %v1285
      %v1287 = vsub.f32 %v1276, %v1286
      %1288 = vst [vmem:[%s236] sm:$0xff] %v1287
      %p1289 = scmp.lt.s32.totalorder %s16, 1
      %s1290 = scalar_select %p1289, %s16, 1
      %s1291 = smul.addr %s1290, 8
      %s1292 = scalar_lea.vmem %s5, %s1291
      // Predicated region
      $region41: #{hgp_forward.1} parent=39 // pred_check
        %p1293 = pneg %p149
      $region42: #{hgp_forward.1} parent=39 // pred_check_branch
        %1295 = sbr.rel (%p1293) target = $region44
      $region43: #{hgp_forward.1} parent=39 // pred_region
        _
      $region44: #{hgp_forward.1} parent=39 // pred_fallthru
        _
    $region40: #{hgp_forward.1} parent=5 // pred_fallthru
      _
    %p1296 = scmp.le.s32.totalorder 2, %s11
    // Predicated region
    $region45: #{hgp_forward.1} parent=5 // pred_check
      %p1297 = pneg %p1296
    $region46: #{hgp_forward.1} parent=5 // pred_check_branch
      %1299 = sbr.rel (%p1297) target = $region48
    $region47: #{hgp_forward.1} parent=5 // pred_region
      %s1300 = ssub.s32 %s11, 2
      // Predicated region
      $region49: #{hgp_forward.1} parent=47 // pred_check
        %p1301 = pneg %p155
      $region50: #{hgp_forward.1} parent=47 // pred_check_branch
        %1303 = sbr.rel (%p1301) target = $region52
      $region51: #{hgp_forward.1} parent=47 // pred_region
        %p1304 = scmp.lt.s32.totalorder %s17, 1
        %s1305 = scalar_select %p1304, %s17, 1
        %s1306 = smul.addr %s1305, 8
        %s1307 = scalar_lea.vmem %s5, %s1306
      $region52: #{hgp_forward.1} parent=47 // pred_fallthru
        _
    $region48: #{hgp_forward.1} parent=5 // pred_fallthru
      _
  $region6: #{hgp_forward.1} parent=0 // loop_footer
    %s15 = sadd.s32 1, %s11
  $region7: #{hgp_forward.1} parent=0 // loop_footer_branch
    %10 = sbr.rel target = $region3
  $region8: #{hgp_forward.1} parent=0 // loop_exit
    _

</llo_original>
